<compile_context>
chip_gen: v6e
topology: v6e:2x2x1
jax: 0.10.0
libtpu: 0.0.40
codegen_flags: <defaults>
</compile_context>

<pallas_src>
import numpy as np
import jax
import jax.numpy as jnp
from jax import lax
from jax.experimental import pallas as pl
from jax.experimental.pallas import tpu as pltpu

FEAT_DIM = 32
NUM_NODES = 8
ALPHA = 0.2
LANE = 128


# TODO(synk): sortNodes is undefined in the reference source; use a
# deterministic sort of neighbor keys by descending edge weight (ties by key).
def sort_nodes(d):
    return [k for k, _ in sorted(d.items(), key=lambda kv: (-kv[1], kv[0]))]


# ----------------------------- host-side planning -----------------------------


def build_steps(weight_dict):
    """Flatten the recursive GRU tree combination into a static step table.

    Each step is (h_kind, h_idx, x_kind, x_idx, out_node):
      kind == 0 -> operand is row `idx` of `inputs`
      kind == 1 -> operand is the result of earlier step `idx`
    The last step emitted for a node is its tree root (PyTorch's final temp_out).
    """
    steps = []
    for idx, nd in weight_dict.items():
        if len(nd) == 1:
            k = list(nd.keys())[0]
            steps.append((0, k, 0, k, idx))
        elif len(nd) == 2:
            keys = list(nd.keys())
            steps.append((0, keys[0], 0, keys[1], idx))
        else:
            local = {}
            count = 10000
            lst = sort_nodes(nd)
            n1, n2 = lst[0], lst[1]
            local[count] = len(steps)
            steps.append((0, n1, 0, n2, idx))
            tnd = {k: w for k, w in nd.items() if k not in (n1, n2)}
            tnd[count] = nd[n1] + nd[n2]
            count += 1
            while len(tnd) > 1:
                lst = sort_nodes(tnd)
                n1, n2 = lst[0], lst[1]
                hk, hi = (1, local[n1]) if n1 >= 10000 else (0, n1)
                xk, xi = (1, local[n2]) if n2 >= 10000 else (0, n2)
                local[count] = len(steps)
                steps.append((hk, hi, xk, xi, idx))
                val = tnd[n1] + tnd[n2]
                tnd = {k: w for k, w in tnd.items() if k not in (n1, n2)}
                tnd[count] = val
                count += 1
    return steps


def build_plan(weight_dict, num_nodes):
    """Topological levels, 8-aligned row layout, one-hot selection matrices."""
    steps = build_steps(weight_dict)
    level_of = []
    for (hk, hi, xk, xi, _) in steps:
        lh = level_of[hi] + 1 if hk == 1 else 0
        lx = level_of[xi] + 1 if xk == 1 else 0
        level_of.append(max(lh, lx))
    n_levels = (max(level_of) + 1) if steps else 0
    levels = [[] for _ in range(n_levels)]
    for s, lv in enumerate(level_of):
        levels[lv].append(s)

    b_max = max((len(l) for l in levels), default=1)
    b_pad = max(8, -(-b_max // 8) * 8)            # per-level batch, mult. of 8
    n_base = -(-num_nodes // 8) * 8               # inputs region, mult. of 8
    row_base = [n_base + lv * b_pad for lv in range(n_levels)]
    total_rows = n_base + max(n_levels, 1) * b_pad

    step_row = [0] * len(steps)
    for lv, sl in enumerate(levels):
        for j, s in enumerate(sl):
            step_row[s] = row_base[lv] + j

    # One-hot operand-selection matrices (levels stacked along rows) and the
    # root-selection matrix: these turn row gathers / outs assembly into MXU
    # matmuls inside the kernel (no masked single-row stores).
    sel_h = np.zeros((max(n_levels, 1) * b_pad, total_rows), np.float32)
    sel_x = np.zeros_like(sel_h)
    for lv, sl in enumerate(levels):
        for j, s in enumerate(sl):
            hk, hi, xk, xi, _ = steps[s]
            hrow = hi if hk == 0 else step_row[hi]
            xrow = xi if xk == 0 else step_row[xi]
            sel_h[lv * b_pad + j, hrow] = 1.0
            sel_x[lv * b_pad + j, xrow] = 1.0

    root_sel = np.zeros((num_nodes, total_rows), np.float32)
    root_step = {}
    for s, st in enumerate(steps):
        root_step[st[4]] = s                      # last step per node = root
    for node, s in root_step.items():
        root_sel[node, step_row[s]] = 1.0

    return dict(n_levels=n_levels, b_pad=b_pad, row_base=row_base,
                total_rows=total_rows, sel_h=sel_h, sel_x=sel_x,
                root_sel=root_sel)


# ----------------------------- fused Pallas kernel -----------------------------


def make_fused_kernel(n_levels, b_pad, row_base, num_nodes, feat_dim,
                      lane_pad, alpha):
    F = feat_dim
    N = num_nodes
    NP = lane_pad

    def kernel(inputs_ref, selh_ref, selx_ref, rootsel_ref, w_ref, b_ref,
               a1_ref, a2_ref, adjp_ref, att_ref, buf):
        # Unified operand buffer: rows [0, N) = inputs, level lv results live
        # at rows [row_base[lv], row_base[lv] + b_pad).  Zero-fill first: the
        # selection matmuls read the whole buffer, so 0 * unwritten must be 0.
        buf[...] = jnp.zeros_like(buf)
        buf[pl.ds(0, N), :] = inputs_ref[...]

        w = w_ref[...]                                            # (2F, 4F)
        bias = jnp.broadcast_to(b_ref[...], (b_pad, 4 * F))       # hoisted once

        # Level-batched GRU tree reduction (fully unrolled; step structure is
        # static, so all indices below are compile-time constants).
        for lv in range(n_levels):
            bufv = buf[...]                                       # (R, F)
            sel_h = selh_ref[pl.ds(lv * b_pad, b_pad), :]         # (b_pad, R)
            sel_x = selx_ref[pl.ds(lv * b_pad, b_pad), :]
            h_mat = jnp.dot(sel_h, bufv, preferred_element_type=jnp.float32)
            x_mat = jnp.dot(sel_x, bufv, preferred_element_type=jnp.float32)
            # Single lane-dense packed-gate matmul: (b_pad, 2F) @ (2F, 4F).
            xh = jnp.concatenate([x_mat, h_mat], axis=1)
            g = jnp.dot(xh, w, preferred_element_type=jnp.float32) + bias
            rz = jax.nn.sigmoid(g[:, :2 * F])                     # one wide EUP pass
            r = rz[:, :F]
            z = rz[:, F:2 * F]
            n_gate = jnp.tanh(g[:, 2 * F:3 * F] + r * g[:, 3 * F:4 * F])
            h_new = (1.0 - z) * n_gate + z * h_mat                # (b_pad, F)
            buf[pl.ds(row_base[lv], b_pad), :] = h_new            # aligned block store

        # Root selection -> outs (rows of nodes absent from weight_dict stay 0).
        outs = jnp.dot(rootsel_ref[...], buf[...],
                       preferred_element_type=jnp.float32)        # (N, F)

        # GAT-style attention, fused; columns lane-padded to NP (sliced outside).
        s1 = jnp.sum(outs * a1_ref[...], axis=-1, keepdims=True)  # (N, 1) VPU+XLU
        s2 = lax.dot_general(a2_ref[...], outs, (((1,), (1,)), ((), ())),
                             preferred_element_type=jnp.float32)  # (1, N)
        if NP > N:
            s2p = jnp.concatenate(
                [s2, jnp.zeros((1, NP - N), jnp.float32)], axis=1)  # (1, NP)
        else:
            s2p = s2
        e = s1 + s2p                                              # (N, NP)
        e = jnp.where(e > 0, e, alpha * e)                        # LeakyReLU
        e = jnp.where(adjp_ref[...] > 0, e, jnp.full_like(e, -9.0e15))
        m = jnp.max(e, axis=1, keepdims=True)
        p = jnp.exp(e - m)
        denom = jnp.sum(p, axis=1, keepdims=True)
        att_ref[...] = p / denom            # exact normalize: rows sum to 1

    return kernel


def _full_spec(shape):
    zeros = (0,) * len(shape)
    return pl.BlockSpec(shape, lambda i, _z=zeros: _z)


def recursiver_layer_forward(inputs, adj, weight_dict, params, alpha):
    n, f = inputs.shape
    plan = build_plan(weight_dict, n)
    n_levels, b_pad = plan["n_levels"], plan["b_pad"]
    row_base, total_rows = plan["row_base"], plan["total_rows"]

    lane_pad = max(LANE, -(-n // LANE) * LANE)

    # Packed GRU weights: one (2F, 4F) matrix, columns [ r | z | n_x | n_h ],
    # rows [ x-path (wih) ; h-path (whh) ]; biases folded into one (1, 4F) row.
    wih, whh, bih, bhh = params["wih"], params["whh"], params["bih"], params["bhh"]
    zff = jnp.zeros((f, f), jnp.float32)
    w_packed = jnp.concatenate([
        jnp.concatenate([wih[0], wih[1], wih[2], zff], axis=1),
        jnp.concatenate([whh[0], whh[1], zff, whh[2]], axis=1)], axis=0)
    b_packed = jnp.concatenate(
        [bih[0] + bhh[0], bih[1] + bhh[1], bih[2], bhh[2]], axis=1)

    adj_pad = jnp.zeros((n, lane_pad), jnp.float32).at[:, :n].set(adj)

    kernel = make_fused_kernel(n_levels, b_pad, row_base, n, f, lane_pad, alpha)

    operands = (inputs,
                jnp.asarray(plan["sel_h"]), jnp.asarray(plan["sel_x"]),
                jnp.asarray(plan["root_sel"]),
                w_packed, b_packed,
                params["a1_row"], params["a2_row"], adj_pad)

    att_pad = pl.pallas_call(
        kernel,
        out_shape=jax.ShapeDtypeStruct((n, lane_pad), jnp.float32),
        grid_spec=pltpu.PrefetchScalarGridSpec(
            num_scalar_prefetch=0,
            grid=(1,),
            in_specs=[_full_spec(x.shape) for x in operands],
            out_specs=_full_spec((n, lane_pad)),
            scratch_shapes=[pltpu.VMEM((total_rows, f), jnp.float32)],
        ),
        compiler_params=pltpu.CompilerParams(
            dimension_semantics=("arbitrary",)),
    )(*operands)
    return att_pad[:, :n]


# ----------------------------- reference (pure JAX, mirrors torch) -----------


def gru_cell_ref(x, h, wih, whh, bih, bhh):
    hp = lax.Precision.HIGHEST
    r = jax.nn.sigmoid(jnp.dot(x, wih[0], precision=hp) + bih[0] +
                       jnp.dot(h, whh[0], precision=hp) + bhh[0])
    z = jax.nn.sigmoid(jnp.dot(x, wih[1], precision=hp) + bih[1] +
                       jnp.dot(h, whh[1], precision=hp) + bhh[1])
    nn = jnp.tanh(jnp.dot(x, wih[2], precision=hp) + bih[2] +
                  r * (jnp.dot(h, whh[2], precision=hp) + bhh[2]))
    return (1.0 - z) * nn + z * h


def reference_forward(inputs, adj, weight_dict, params, alpha):
    wih, whh, bih, bhh = params["wih"], params["whh"], params["bih"], params["bhh"]
    gru = lambda x2, x1: gru_cell_ref(x2, x1, wih, whh, bih, bhh)
    temp_outs = {}
    for idx, nd in weight_dict.items():
        if len(nd) == 1:
            nl = list(nd.keys()); nl.append(nl[0])
            temp_out = gru(inputs[nl[1]].reshape(1, -1), inputs[nl[0]].reshape(1, -1))
        elif len(nd) == 2:
            nl = list(nd.keys())
            temp_out = gru(inputs[nl[1]].reshape(1, -1), inputs[nl[0]].reshape(1, -1))
        else:
            count = 10000
            temp_dict = {}
            nl = sort_nodes(nd)
            n1, n2 = nl[0], nl[1]
            temp_out = gru(inputs[n2].reshape(1, -1), inputs[n1].reshape(1, -1))
            temp_dict[count] = temp_out
            tnd = {k: w for k, w in nd.items() if k not in (n1, n2)}
            tnd[count] = nd[n1] + nd[n2]
            count += 1
            while len(tnd) > 1:
                nl = sort_nodes(tnd)
                n1, n2 = nl[0], nl[1]
                x1 = temp_dict[n1] if n1 >= 10000 else inputs[n1].reshape(1, -1)
                x2 = temp_dict[n2] if n2 >= 10000 else inputs[n2].reshape(1, -1)
                temp_out = gru(x2, x1)
                temp_dict[count] = temp_out
                val = tnd[n1] + tnd[n2]
                tnd = {k: w for k, w in tnd.items() if k not in (n1, n2)}
                tnd[count] = val
                count += 1
            temp_out = temp_dict[count - 1]
        temp_outs[idx] = temp_out
    outs = jnp.zeros_like(inputs)
    for idx, v in temp_outs.items():
        outs = outs.at[idx, :].set(v[0])
    hp = lax.Precision.HIGHEST
    s1 = jnp.dot(outs, params["a1_row"].T, precision=hp)     # (N, 1)
    s2 = jnp.dot(outs, params["a2_row"].T, precision=hp)     # (N, 1)
    e = s1 + s2.T
    e = jnp.where(e > 0, e, alpha * e)
    e = jnp.where(adj > 0, e, -9.0e15)
    return jax.nn.softmax(e, axis=1)


# ----------------------------- setup & main -----------------------------


def init_params(key, feat_dim):
    ks = jax.random.split(key, 5)
    scale = 1.0 / jnp.sqrt(jnp.float32(feat_dim))
    wih = jax.random.normal(ks[0], (3, feat_dim, feat_dim), jnp.float32) * scale
    whh = jax.random.normal(ks[1], (3, feat_dim, feat_dim), jnp.float32) * scale
    bih = jax.random.normal(ks[2], (3, 1, feat_dim), jnp.float32) * scale
    bhh = jax.random.normal(ks[3], (3, 1, feat_dim), jnp.float32) * scale
    # TODO(synk): `self.a` is used in forward() but never defined in __init__
    # of the reference; synthesize the standard GAT (2F, 1) attention vector.
    # `self.V` / hidden_dim / num_class are unused in forward() and omitted.
    a = jax.random.normal(ks[4], (2 * feat_dim, 1), jnp.float32) * (1.414 * scale)
    return dict(wih=wih, whh=whh, bih=bih, bhh=bhh,
                a1_row=a[:feat_dim, :].T, a2_row=a[feat_dim:, :].T)


if __name__ == "__main__":
    key = jax.random.PRNGKey(0)
    k_in, k_par = jax.random.split(key)
    inputs = jax.random.normal(k_in, (NUM_NODES, FEAT_DIM), jnp.float32)
    params = init_params(k_par, FEAT_DIM)

    # Static neighbor-weight dictionary covering all nodes; exercises the
    # 1-neighbor, 2-neighbor and >2-neighbor (recursive tree) branches.
    weight_dict = {
        0: {1: 0.5},
        1: {0: 0.3, 2: 0.7},
        2: {1: 0.2, 3: 0.9, 4: 0.4},
        3: {2: 0.6, 5: 0.1, 6: 0.8, 7: 0.3},
        4: {2: 0.4},
        5: {3: 0.1, 6: 0.5},
        6: {3: 0.8, 5: 0.5, 7: 0.2},
        7: {3: 0.3, 6: 0.2},
    }

    adj = jnp.eye(NUM_NODES, dtype=jnp.float32)
    for i, nd in weight_dict.items():
        for j in nd:
            adj = adj.at[i, j].set(1.0)

    att = recursiver_layer_forward(inputs, adj, weight_dict, params, ALPHA)
    att = jax.block_until_ready(att)

    ref = reference_forward(inputs, adj, weight_dict, params, ALPHA)
    assert att.shape == (NUM_NODES, NUM_NODES)
    # Exact division in the kernel softmax -> rows sum to 1 to f32 precision.
    row_sums = jnp.sum(att, axis=1)
    assert bool(jnp.allclose(row_sums, 1.0, atol=1e-3)), row_sums
    max_err = float(jnp.max(jnp.abs(att - ref)))
    assert max_err < 5e-3, max_err
    print("KERNEL_OK")
</pallas_src>

<mosaic_0001>
module attributes {stable_mosaic.version = 11 : i64} {
  func.func @kernel(%arg0: i32, %arg1: memref<8x32xf32, #tpu.memory_space<vmem>>, %arg2: memref<24x32xf32, #tpu.memory_space<vmem>>, %arg3: memref<24x32xf32, #tpu.memory_space<vmem>>, %arg4: memref<8x32xf32, #tpu.memory_space<vmem>>, %arg5: memref<64x128xf32, #tpu.memory_space<vmem>>, %arg6: memref<1x128xf32, #tpu.memory_space<vmem>>, %arg7: memref<1x32xf32, #tpu.memory_space<vmem>>, %arg8: memref<1x32xf32, #tpu.memory_space<vmem>>, %arg9: memref<8x128xf32, #tpu.memory_space<vmem>>, %arg10: memref<8x128xf32, #tpu.memory_space<vmem>>, %arg11: memref<32x32xf32, #tpu.memory_space<vmem>>) attributes {dimension_semantics = [#tpu.dimension_semantics<arbitrary>], iteration_bounds = array<i64: 1>, scalar_prefetch = 0 : i64, scratch_operands = 1 : i64, tpu.core_type = #tpu.core_type<tc>, window_params = [{pipeline_mode = #tpu.pipeline_mode<synchronous>, transform_indices = @transform_0, window_bounds = array<i64: 8, 32>}, {pipeline_mode = #tpu.pipeline_mode<synchronous>, transform_indices = @transform_1, window_bounds = array<i64: 24, 32>}, {pipeline_mode = #tpu.pipeline_mode<synchronous>, transform_indices = @transform_2, window_bounds = array<i64: 24, 32>}, {pipeline_mode = #tpu.pipeline_mode<synchronous>, transform_indices = @transform_3, window_bounds = array<i64: 8, 32>}, {pipeline_mode = #tpu.pipeline_mode<synchronous>, transform_indices = @transform_4, window_bounds = array<i64: 64, 128>}, {pipeline_mode = #tpu.pipeline_mode<synchronous>, transform_indices = @transform_5, window_bounds = array<i64: 1, 128>}, {pipeline_mode = #tpu.pipeline_mode<synchronous>, transform_indices = @transform_6, window_bounds = array<i64: 1, 32>}, {pipeline_mode = #tpu.pipeline_mode<synchronous>, transform_indices = @transform_7, window_bounds = array<i64: 1, 32>}, {pipeline_mode = #tpu.pipeline_mode<synchronous>, transform_indices = @transform_8, window_bounds = array<i64: 8, 128>}, {pipeline_mode = #tpu.pipeline_mode<synchronous>, transform_indices = @transform_9, window_bounds = array<i64: 8, 128>}]} {
    %cst = arith.constant 0.000000e+00 : f32
    %0 = vector.broadcast %cst : f32 to vector<32x32xf32>
    %c0 = arith.constant 0 : index
    %c0_0 = arith.constant 0 : index
    %1 = vector.load %arg11[%c0, %c0_0] : memref<32x32xf32, #tpu.memory_space<vmem>>, vector<32x32xf32>
    tpu.vector_store %arg11[%c0, %c0_0], %0 {strides = array<i32>} : memref<32x32xf32, #tpu.memory_space<vmem>>, vector<32x32xf32>,
    %c0_1 = arith.constant 0 : index
    %c0_2 = arith.constant 0 : index
    %2 = vector.load %arg1[%c0_1, %c0_2] : memref<8x32xf32, #tpu.memory_space<vmem>>, vector<8x32xf32>
    %c0_3 = arith.constant 0 : index
    %c0_4 = arith.constant 0 : index
    %3 = vector.load %arg11[%c0_3, %c0_4] : memref<32x32xf32, #tpu.memory_space<vmem>>, vector<8x32xf32>
    tpu.vector_store %arg11[%c0_3, %c0_4], %2 {strides = array<i32>} : memref<32x32xf32, #tpu.memory_space<vmem>>, vector<8x32xf32>,
    %c0_5 = arith.constant 0 : index
    %c0_6 = arith.constant 0 : index
    %4 = vector.load %arg5[%c0_5, %c0_6] : memref<64x128xf32, #tpu.memory_space<vmem>>, vector<64x128xf32>
    %c0_7 = arith.constant 0 : index
    %c0_8 = arith.constant 0 : index
    %5 = vector.load %arg6[%c0_7, %c0_8] : memref<1x128xf32, #tpu.memory_space<vmem>>, vector<1x128xf32>
    %6 = vector.shape_cast %5 : vector<1x128xf32> to vector<1x128xf32>
    %7 = vector.broadcast %6 : vector<1x128xf32> to vector<8x128xf32>
    %c0_9 = arith.constant 0 : index
    %c0_10 = arith.constant 0 : index
    %8 = vector.load %arg11[%c0_9, %c0_10] : memref<32x32xf32, #tpu.memory_space<vmem>>, vector<32x32xf32>
    %c0_11 = arith.constant 0 : index
    %c0_12 = arith.constant 0 : index
    %9 = vector.load %arg2[%c0_11, %c0_12] : memref<24x32xf32, #tpu.memory_space<vmem>>, vector<8x32xf32>
    %c0_13 = arith.constant 0 : index
    %c0_14 = arith.constant 0 : index
    %10 = vector.load %arg3[%c0_13, %c0_14] : memref<24x32xf32, #tpu.memory_space<vmem>>, vector<8x32xf32>
    %cst_15 = arith.constant dense<0.000000e+00> : vector<8x32xf32>
    %11 = tpu.matmul %9, %8, %cst_15 {dimension_numbers = #tpu.dot_dimension_numbers<[1], [0], [0], [1], [0, 0, 1, 1], [], []>} : vector<8x32xf32>, vector<32x32xf32>, vector<8x32xf32> -> vector<8x32xf32>
    %cst_16 = arith.constant dense<0.000000e+00> : vector<8x32xf32>
    %12 = tpu.matmul %10, %8, %cst_16 {dimension_numbers = #tpu.dot_dimension_numbers<[1], [0], [0], [1], [0, 0, 1, 1], [], []>} : vector<8x32xf32>, vector<32x32xf32>, vector<8x32xf32> -> vector<8x32xf32>
    %13 = tpu.concatenate %12, %11 in 1 : vector<8x32xf32>, vector<8x32xf32> -> vector<8x64xf32>
    %cst_17 = arith.constant dense<0.000000e+00> : vector<8x128xf32>
    %14 = tpu.matmul %13, %4, %cst_17 {dimension_numbers = #tpu.dot_dimension_numbers<[1], [0], [0], [1], [0, 0, 1, 1], [], []>} : vector<8x64xf32>, vector<64x128xf32>, vector<8x128xf32> -> vector<8x128xf32>
    %15 = arith.addf %14, %7 : vector<8x128xf32>
    %16 = vector.extract_strided_slice %15 {offsets = [0, 0], sizes = [8, 64], strides = [1, 1]} : vector<8x128xf32> to vector<8x64xf32>
    %17 = arith.negf %16 : vector<8x64xf32>
    %18 = math.exp %17 : vector<8x64xf32>
    %cst_18 = arith.constant 1.000000e+00 : f32
    %19 = vector.broadcast %cst_18 : f32 to vector<8x64xf32>
    %20 = arith.addf %19, %18 : vector<8x64xf32>
    %21 = arith.divf %19, %20 : vector<8x64xf32>
    %22 = vector.extract_strided_slice %21 {offsets = [0, 0], sizes = [8, 32], strides = [1, 1]} : vector<8x64xf32> to vector<8x32xf32>
    %23 = vector.extract_strided_slice %21 {offsets = [0, 32], sizes = [8, 32], strides = [1, 1]} : vector<8x64xf32> to vector<8x32xf32>
    %24 = vector.extract_strided_slice %15 {offsets = [0, 64], sizes = [8, 32], strides = [1, 1]} : vector<8x128xf32> to vector<8x32xf32>
    %25 = vector.extract_strided_slice %15 {offsets = [0, 96], sizes = [8, 32], strides = [1, 1]} : vector<8x128xf32> to vector<8x32xf32>
    %26 = arith.mulf %22, %25 : vector<8x32xf32>
    %27 = arith.addf %24, %26 : vector<8x32xf32>
    %28 = math.tanh %27 : vector<8x32xf32>
    %cst_19 = arith.constant 1.000000e+00 : f32
    %29 = vector.broadcast %cst_19 : f32 to vector<8x32xf32>
    %30 = arith.subf %29, %23 : vector<8x32xf32>
    %31 = arith.mulf %30, %28 : vector<8x32xf32>
    %32 = arith.mulf %23, %11 : vector<8x32xf32>
    %33 = arith.addf %31, %32 : vector<8x32xf32>
    %c8 = arith.constant 8 : index
    %c0_20 = arith.constant 0 : index
    %34 = vector.load %arg11[%c8, %c0_20] : memref<32x32xf32, #tpu.memory_space<vmem>>, vector<8x32xf32>
    tpu.vector_store %arg11[%c8, %c0_20], %33 {strides = array<i32>} : memref<32x32xf32, #tpu.memory_space<vmem>>, vector<8x32xf32>,
    %c0_21 = arith.constant 0 : index
    %c0_22 = arith.constant 0 : index
    %35 = vector.load %arg11[%c0_21, %c0_22] : memref<32x32xf32, #tpu.memory_space<vmem>>, vector<32x32xf32>
    %c8_23 = arith.constant 8 : index
    %c0_24 = arith.constant 0 : index
    %36 = vector.load %arg2[%c8_23, %c0_24] : memref<24x32xf32, #tpu.memory_space<vmem>>, vector<8x32xf32>
    %c8_25 = arith.constant 8 : index
    %c0_26 = arith.constant 0 : index
    %37 = vector.load %arg3[%c8_25, %c0_26] : memref<24x32xf32, #tpu.memory_space<vmem>>, vector<8x32xf32>
    %cst_27 = arith.constant dense<0.000000e+00> : vector<8x32xf32>
    %38 = tpu.matmul %36, %35, %cst_27 {dimension_numbers = #tpu.dot_dimension_numbers<[1], [0], [0], [1], [0, 0, 1, 1], [], []>} : vector<8x32xf32>, vector<32x32xf32>, vector<8x32xf32> -> vector<8x32xf32>
    %cst_28 = arith.constant dense<0.000000e+00> : vector<8x32xf32>
    %39 = tpu.matmul %37, %35, %cst_28 {dimension_numbers = #tpu.dot_dimension_numbers<[1], [0], [0], [1], [0, 0, 1, 1], [], []>} : vector<8x32xf32>, vector<32x32xf32>, vector<8x32xf32> -> vector<8x32xf32>
    %40 = tpu.concatenate %39, %38 in 1 : vector<8x32xf32>, vector<8x32xf32> -> vector<8x64xf32>
    %cst_29 = arith.constant dense<0.000000e+00> : vector<8x128xf32>
    %41 = tpu.matmul %40, %4, %cst_29 {dimension_numbers = #tpu.dot_dimension_numbers<[1], [0], [0], [1], [0, 0, 1, 1], [], []>} : vector<8x64xf32>, vector<64x128xf32>, vector<8x128xf32> -> vector<8x128xf32>
    %42 = arith.addf %41, %7 : vector<8x128xf32>
    %43 = vector.extract_strided_slice %42 {offsets = [0, 0], sizes = [8, 64], strides = [1, 1]} : vector<8x128xf32> to vector<8x64xf32>
    %44 = arith.negf %43 : vector<8x64xf32>
    %45 = math.exp %44 : vector<8x64xf32>
    %cst_30 = arith.constant 1.000000e+00 : f32
    %46 = vector.broadcast %cst_30 : f32 to vector<8x64xf32>
    %47 = arith.addf %46, %45 : vector<8x64xf32>
    %48 = arith.divf %46, %47 : vector<8x64xf32>
    %49 = vector.extract_strided_slice %48 {offsets = [0, 0], sizes = [8, 32], strides = [1, 1]} : vector<8x64xf32> to vector<8x32xf32>
    %50 = vector.extract_strided_slice %48 {offsets = [0, 32], sizes = [8, 32], strides = [1, 1]} : vector<8x64xf32> to vector<8x32xf32>
    %51 = vector.extract_strided_slice %42 {offsets = [0, 64], sizes = [8, 32], strides = [1, 1]} : vector<8x128xf32> to vector<8x32xf32>
    %52 = vector.extract_strided_slice %42 {offsets = [0, 96], sizes = [8, 32], strides = [1, 1]} : vector<8x128xf32> to vector<8x32xf32>
    %53 = arith.mulf %49, %52 : vector<8x32xf32>
    %54 = arith.addf %51, %53 : vector<8x32xf32>
    %55 = math.tanh %54 : vector<8x32xf32>
    %cst_31 = arith.constant 1.000000e+00 : f32
    %56 = vector.broadcast %cst_31 : f32 to vector<8x32xf32>
    %57 = arith.subf %56, %50 : vector<8x32xf32>
    %58 = arith.mulf %57, %55 : vector<8x32xf32>
    %59 = arith.mulf %50, %38 : vector<8x32xf32>
    %60 = arith.addf %58, %59 : vector<8x32xf32>
    %c16 = arith.constant 16 : index
    %c0_32 = arith.constant 0 : index
    %61 = vector.load %arg11[%c16, %c0_32] : memref<32x32xf32, #tpu.memory_space<vmem>>, vector<8x32xf32>
    tpu.vector_store %arg11[%c16, %c0_32], %60 {strides = array<i32>} : memref<32x32xf32, #tpu.memory_space<vmem>>, vector<8x32xf32>,
    %c0_33 = arith.constant 0 : index
    %c0_34 = arith.constant 0 : index
    %62 = vector.load %arg11[%c0_33, %c0_34] : memref<32x32xf32, #tpu.memory_space<vmem>>, vector<32x32xf32>
    %c16_35 = arith.constant 16 : index
    %c0_36 = arith.constant 0 : index
    %63 = vector.load %arg2[%c16_35, %c0_36] : memref<24x32xf32, #tpu.memory_space<vmem>>, vector<8x32xf32>
    %c16_37 = arith.constant 16 : index
    %c0_38 = arith.constant 0 : index
    %64 = vector.load %arg3[%c16_37, %c0_38] : memref<24x32xf32, #tpu.memory_space<vmem>>, vector<8x32xf32>
    %cst_39 = arith.constant dense<0.000000e+00> : vector<8x32xf32>
    %65 = tpu.matmul %63, %62, %cst_39 {dimension_numbers = #tpu.dot_dimension_numbers<[1], [0], [0], [1], [0, 0, 1, 1], [], []>} : vector<8x32xf32>, vector<32x32xf32>, vector<8x32xf32> -> vector<8x32xf32>
    %cst_40 = arith.constant dense<0.000000e+00> : vector<8x32xf32>
    %66 = tpu.matmul %64, %62, %cst_40 {dimension_numbers = #tpu.dot_dimension_numbers<[1], [0], [0], [1], [0, 0, 1, 1], [], []>} : vector<8x32xf32>, vector<32x32xf32>, vector<8x32xf32> -> vector<8x32xf32>
    %67 = tpu.concatenate %66, %65 in 1 : vector<8x32xf32>, vector<8x32xf32> -> vector<8x64xf32>
    %cst_41 = arith.constant dense<0.000000e+00> : vector<8x128xf32>
    %68 = tpu.matmul %67, %4, %cst_41 {dimension_numbers = #tpu.dot_dimension_numbers<[1], [0], [0], [1], [0, 0, 1, 1], [], []>} : vector<8x64xf32>, vector<64x128xf32>, vector<8x128xf32> -> vector<8x128xf32>
    %69 = arith.addf %68, %7 : vector<8x128xf32>
    %70 = vector.extract_strided_slice %69 {offsets = [0, 0], sizes = [8, 64], strides = [1, 1]} : vector<8x128xf32> to vector<8x64xf32>
    %71 = arith.negf %70 : vector<8x64xf32>
    %72 = math.exp %71 : vector<8x64xf32>
    %cst_42 = arith.constant 1.000000e+00 : f32
    %73 = vector.broadcast %cst_42 : f32 to vector<8x64xf32>
    %74 = arith.addf %73, %72 : vector<8x64xf32>
    %75 = arith.divf %73, %74 : vector<8x64xf32>
    %76 = vector.extract_strided_slice %75 {offsets = [0, 0], sizes = [8, 32], strides = [1, 1]} : vector<8x64xf32> to vector<8x32xf32>
    %77 = vector.extract_strided_slice %75 {offsets = [0, 32], sizes = [8, 32], strides = [1, 1]} : vector<8x64xf32> to vector<8x32xf32>
    %78 = vector.extract_strided_slice %69 {offsets = [0, 64], sizes = [8, 32], strides = [1, 1]} : vector<8x128xf32> to vector<8x32xf32>
    %79 = vector.extract_strided_slice %69 {offsets = [0, 96], sizes = [8, 32], strides = [1, 1]} : vector<8x128xf32> to vector<8x32xf32>
    %80 = arith.mulf %76, %79 : vector<8x32xf32>
    %81 = arith.addf %78, %80 : vector<8x32xf32>
    %82 = math.tanh %81 : vector<8x32xf32>
    %cst_43 = arith.constant 1.000000e+00 : f32
    %83 = vector.broadcast %cst_43 : f32 to vector<8x32xf32>
    %84 = arith.subf %83, %77 : vector<8x32xf32>
    %85 = arith.mulf %84, %82 : vector<8x32xf32>
    %86 = arith.mulf %77, %65 : vector<8x32xf32>
    %87 = arith.addf %85, %86 : vector<8x32xf32>
    %c24 = arith.constant 24 : index
    %c0_44 = arith.constant 0 : index
    %88 = vector.load %arg11[%c24, %c0_44] : memref<32x32xf32, #tpu.memory_space<vmem>>, vector<8x32xf32>
    tpu.vector_store %arg11[%c24, %c0_44], %87 {strides = array<i32>} : memref<32x32xf32, #tpu.memory_space<vmem>>, vector<8x32xf32>,
    %c0_45 = arith.constant 0 : index
    %c0_46 = arith.constant 0 : index
    %89 = vector.load %arg4[%c0_45, %c0_46] : memref<8x32xf32, #tpu.memory_space<vmem>>, vector<8x32xf32>
    %c0_47 = arith.constant 0 : index
    %c0_48 = arith.constant 0 : index
    %90 = vector.load %arg11[%c0_47, %c0_48] : memref<32x32xf32, #tpu.memory_space<vmem>>, vector<32x32xf32>
    %cst_49 = arith.constant dense<0.000000e+00> : vector<8x32xf32>
    %91 = tpu.matmul %89, %90, %cst_49 {dimension_numbers = #tpu.dot_dimension_numbers<[1], [0], [0], [1], [0, 0, 1, 1], [], []>} : vector<8x32xf32>, vector<32x32xf32>, vector<8x32xf32> -> vector<8x32xf32>
    %c0_50 = arith.constant 0 : index
    %c0_51 = arith.constant 0 : index
    %92 = vector.load %arg7[%c0_50, %c0_51] : memref<1x32xf32, #tpu.memory_space<vmem>>, vector<1x32xf32>
    %93 = vector.broadcast %92 : vector<1x32xf32> to vector<8x32xf32>
    %94 = arith.mulf %91, %93 : vector<8x32xf32>
    %cst_52 = arith.constant dense<0.000000e+00> : vector<8xf32>
    %95 = vector.multi_reduction <add>, %94, %cst_52 [1] : vector<8x32xf32> to vector<8xf32>
    %96 = vector.shape_cast %95 : vector<8xf32> to vector<8x1xf32>
    %c0_53 = arith.constant 0 : index
    %c0_54 = arith.constant 0 : index
    %97 = vector.load %arg8[%c0_53, %c0_54] : memref<1x32xf32, #tpu.memory_space<vmem>>, vector<1x32xf32>
    %cst_55 = arith.constant dense<0.000000e+00> : vector<1x8xf32>
    %98 = tpu.matmul %97, %91, %cst_55 {dimension_numbers = #tpu.dot_dimension_numbers<[1], [1], [0], [0], [0, 0, 1, 0], [], []>} : vector<1x32xf32>, vector<8x32xf32>, vector<1x8xf32> -> vector<1x8xf32>
    %cst_56 = arith.constant 0.000000e+00 : f32
    %99 = vector.broadcast %cst_56 : f32 to vector<1x120xf32>
    %100 = tpu.concatenate %98, %99 in 1 : vector<1x8xf32>, vector<1x120xf32> -> vector<1x128xf32>
    %101 = vector.broadcast %96 : vector<8x1xf32> to vector<8x128xf32>
    %102 = vector.broadcast %100 : vector<1x128xf32> to vector<8x128xf32>
    %103 = arith.addf %101, %102 : vector<8x128xf32>
    %cst_57 = arith.constant 0.000000e+00 : f32
    %104 = vector.broadcast %cst_57 : f32 to vector<8x128xf32>
    %105 = arith.cmpf ogt, %103, %104 : vector<8x128xf32>
    %cst_58 = arith.constant 2.000000e-01 : f32
    %106 = vector.broadcast %cst_58 : f32 to vector<8x128xf32>
    %107 = arith.mulf %106, %103 : vector<8x128xf32>
    %108 = arith.select %105, %103, %107 : vector<8x128xi1>, vector<8x128xf32>
    %c0_59 = arith.constant 0 : index
    %c0_60 = arith.constant 0 : index
    %109 = vector.load %arg9[%c0_59, %c0_60] : memref<8x128xf32, #tpu.memory_space<vmem>>, vector<8x128xf32>
    %cst_61 = arith.constant 0.000000e+00 : f32
    %110 = vector.broadcast %cst_61 : f32 to vector<8x128xf32>
    %111 = arith.cmpf ogt, %109, %110 : vector<8x128xf32>
    %cst_62 = arith.constant -9.000000e+15 : f32
    %112 = vector.broadcast %cst_62 : f32 to vector<8x128xf32>
    %113 = arith.select %111, %108, %112 : vector<8x128xi1>, vector<8x128xf32>
    %cst_63 = arith.constant dense<0xFF800000> : vector<8xf32>
    %114 = vector.multi_reduction <maximumf>, %113, %cst_63 [1] : vector<8x128xf32> to vector<8xf32>
    %115 = vector.shape_cast %114 : vector<8xf32> to vector<8x1xf32>
    %116 = vector.broadcast %115 : vector<8x1xf32> to vector<8x128xf32>
    %117 = arith.subf %113, %116 : vector<8x128xf32>
    %118 = math.exp %117 : vector<8x128xf32>
    %cst_64 = arith.constant dense<0.000000e+00> : vector<8xf32>
    %119 = vector.multi_reduction <add>, %118, %cst_64 [1] : vector<8x128xf32> to vector<8xf32>
    %120 = vector.shape_cast %119 : vector<8xf32> to vector<8x1xf32>
    %121 = vector.broadcast %120 : vector<8x1xf32> to vector<8x128xf32>
    %122 = arith.divf %118, %121 : vector<8x128xf32>
    %c0_65 = arith.constant 0 : index
    %c0_66 = arith.constant 0 : index
    %123 = vector.load %arg10[%c0_65, %c0_66] : memref<8x128xf32, #tpu.memory_space<vmem>>, vector<8x128xf32>
    tpu.vector_store %arg10[%c0_65, %c0_66], %122 {strides = array<i32>} : memref<8x128xf32, #tpu.memory_space<vmem>>, vector<8x128xf32>,
    return
  }
  func.func @transform_0(%arg0: i32) -> (i32, i32) {
    %c0_i32 = arith.constant 0 : i32
    %c0_i32_0 = arith.constant 0 : i32
    %c0_i32_1 = arith.constant 0 : i32
    return %c0_i32, %c0_i32_0 : i32, i32
  }
  func.func @transform_1(%arg0: i32) -> (i32, i32) {
    %c0_i32 = arith.constant 0 : i32
    %c0_i32_0 = arith.constant 0 : i32
    %c0_i32_1 = arith.constant 0 : i32
    return %c0_i32, %c0_i32_0 : i32, i32
  }
  func.func @transform_2(%arg0: i32) -> (i32, i32) {
    %c0_i32 = arith.constant 0 : i32
    %c0_i32_0 = arith.constant 0 : i32
    %c0_i32_1 = arith.constant 0 : i32
    return %c0_i32, %c0_i32_0 : i32, i32
  }
  func.func @transform_3(%arg0: i32) -> (i32, i32) {
    %c0_i32 = arith.constant 0 : i32
    %c0_i32_0 = arith.constant 0 : i32
    %c0_i32_1 = arith.constant 0 : i32
    return %c0_i32, %c0_i32_0 : i32, i32
  }
  func.func @transform_4(%arg0: i32) -> (i32, i32) {
    %c0_i32 = arith.constant 0 : i32
    %c0_i32_0 = arith.constant 0 : i32
    %c0_i32_1 = arith.constant 0 : i32
    return %c0_i32, %c0_i32_0 : i32, i32
  }
  func.func @transform_5(%arg0: i32) -> (i32, i32) {
    %c0_i32 = arith.constant 0 : i32
    %c0_i32_0 = arith.constant 0 : i32
    %c0_i32_1 = arith.constant 0 : i32
    return %c0_i32, %c0_i32_0 : i32, i32
  }
  func.func @transform_6(%arg0: i32) -> (i32, i32) {
    %c0_i32 = arith.constant 0 : i32
    %c0_i32_0 = arith.constant 0 : i32
    %c0_i32_1 = arith.constant 0 : i32
    return %c0_i32, %c0_i32_0 : i32, i32
  }
  func.func @transform_7(%arg0: i32) -> (i32, i32) {
    %c0_i32 = arith.constant 0 : i32
    %c0_i32_0 = arith.constant 0 : i32
    %c0_i32_1 = arith.constant 0 : i32
    return %c0_i32, %c0_i32_0 : i32, i32
  }
  func.func @transform_8(%arg0: i32) -> (i32, i32) {
    %c0_i32 = arith.constant 0 : i32
    %c0_i32_0 = arith.constant 0 : i32
    %c0_i32_1 = arith.constant 0 : i32
    return %c0_i32, %c0_i32_0 : i32, i32
  }
  func.func @transform_9(%arg0: i32) -> (i32, i32) {
    %c0_i32 = arith.constant 0 : i32
    %c0_i32_0 = arith.constant 0 : i32
    %c0_i32_1 = arith.constant 0 : i32
    return %c0_i32, %c0_i32_0 : i32, i32
  }
}

</mosaic_0001>

<llo_original>
// kernel: tpu_custom_call.1
$region0: #{tpu_custom_call.1}
  #allocation0 [shape = 'u32[]', space=smem, size = 0x4, offset = 0x4, fixed_abs, tag = 'smem constant byte address 0x4 - core index']
  #allocation1 [shape = 'u32[144,128]{1,0:T(1,128)}', space=vmem, size = 0x12000, scoped, tag = 'internal scratch']
  #allocation2 [shape = 'f32[32,32]{1,0:T(8,128)}', space=vmem, size = 0x4000, scoped, tag = 'scratch operand']
  %s0 = inlined_call_operand.hbm [shape: f32[8,32], index: 0, kind: input, shape index: {}]
  %s1 = inlined_call_operand.hbm [shape: f32[24,32], index: 1, kind: input, shape index: {}]
  %s2 = inlined_call_operand.hbm [shape: f32[24,32], index: 2, kind: input, shape index: {}]
  %s3 = inlined_call_operand.hbm [shape: f32[8,32], index: 3, kind: input, shape index: {}]
  %s4 = inlined_call_operand.hbm [shape: f32[64,128], index: 4, kind: input, shape index: {}]
  %s5 = inlined_call_operand.vmem [shape: f32[1,128], index: 5, kind: input, shape index: {}]
  %s6 = inlined_call_operand.vmem [shape: f32[1,32], index: 6, kind: input, shape index: {}]
  %s7 = inlined_call_operand.vmem [shape: f32[1,32], index: 7, kind: input, shape index: {}]
  %s8 = inlined_call_operand.vmem [shape: f32[8,128], index: 8, kind: input, shape index: {}]
  %s9 = inlined_call_operand.hbm [shape: f32[8,128], index: 9, kind: output, shape index: {}]
  %s10 = sld [smem:[#allocation0]]
  $region66: #{tpu_custom_call.1} parent=0
    _
  %s12 = ssub.s32 1, %s10
  %s13 = scalar_select 0, %s12, %s10
  $region1: #{tpu_custom_call.1} parent=0
    #allocation3 [shape = 'u8[4096]{0}', space=vmem, size = 0x1000, scoped, tag = 'input window, operand 0, single buffered']
    #allocation4 [shape = 's32[1]{0}', space=sflag, size = 0x4, scoped, tag = 'scoped memory for tpu_custom_call.1']
    #allocation5 [shape = 's32[1]{0}', space=sflag, size = 0x4, scoped, tag = 'scoped memory for tpu_custom_call.1']
    #allocation6 [shape = 'u8[12288]{0}', space=vmem, size = 0x3000, scoped, tag = 'input window, operand 1, single buffered']
    #allocation7 [shape = 's32[1]{0}', space=sflag, size = 0x4, scoped, tag = 'scoped memory for tpu_custom_call.1']
    #allocation8 [shape = 'u8[12288]{0}', space=vmem, size = 0x3000, scoped, tag = 'input window, operand 2, single buffered']
    #allocation9 [shape = 'u8[4096]{0}', space=vmem, size = 0x1000, scoped, tag = 'input window, operand 3, single buffered']
    #allocation10 [shape = 's32[1]{0}', space=sflag, size = 0x4, scoped, tag = 'scoped memory for tpu_custom_call.1']
    #allocation11 [shape = 'u8[32768]{0}', space=vmem, size = 0x8000, scoped, tag = 'input window, operand 4, single buffered']
    #allocation12 [shape = 'u8[4096]{0}', space=vmem, size = 0x1000, scoped, tag = 'output window, operand 0, single buffered']
    %14 = vsyncpa [#allocation4], 0
    %15 = vsyncpa [#allocation7], 0
    %16 = vsyncpa [#allocation10], 0
    %17 = vsyncpa [#allocation5], 0
    // Predicated region
    $region2: #{tpu_custom_call.1} parent=1 // pred_check
      _
    $region3: #{tpu_custom_call.1} parent=1 // pred_check_branch
      %19 = sbr.rel (0) target = $region5
    $region4: #{tpu_custom_call.1} parent=1 // pred_region
      %s21 = ssub.s32 128, 128
      %22 = vsyncadd [#allocation4], %s21
      %s24 = sshll.u32 [#allocation3], 4
      %s25 = int_to_ptr.vmem [resolvable:$true] %s24
      %27 = dma.hbm_to_vmem [thread:$0]  %s0, 128, %s25, [#allocation4]
    $region5: #{tpu_custom_call.1} parent=1 // pred_fallthru
      _
    // Predicated region
    $region6: #{tpu_custom_call.1} parent=1 // pred_check
      _
    $region7: #{tpu_custom_call.1} parent=1 // pred_check_branch
      %29 = sbr.rel (0) target = $region9
    $region8: #{tpu_custom_call.1} parent=1 // pred_region
      %s31 = ssub.s32 384, 384
      %32 = vsyncadd [#allocation7], %s31
      %s33 = sshll.u32 [#allocation6], 4
      %s34 = int_to_ptr.vmem [resolvable:$true] %s33
      %39 = dma.hbm_to_vmem [thread:$0]  %s1, 384, %s34, [#allocation7], 128, 128, 8
    $region9: #{tpu_custom_call.1} parent=1 // pred_fallthru
      _
    // Predicated region
    $region10: #{tpu_custom_call.1} parent=1 // pred_check
      _
    $region11: #{tpu_custom_call.1} parent=1 // pred_check_branch
      %41 = sbr.rel (0) target = $region13
    $region12: #{tpu_custom_call.1} parent=1 // pred_region
      %s43 = ssub.s32 384, 384
      %44 = vsyncadd [#allocation7], %s43
      %s45 = sshll.u32 [#allocation8], 4
      %s46 = int_to_ptr.vmem [resolvable:$true] %s45
      %51 = dma.hbm_to_vmem [thread:$0]  %s2, 384, %s46, [#allocation7], 128, 128, 8
    $region13: #{tpu_custom_call.1} parent=1 // pred_fallthru
      _
    // Predicated region
    $region14: #{tpu_custom_call.1} parent=1 // pred_check
      _
    $region15: #{tpu_custom_call.1} parent=1 // pred_check_branch
      %53 = sbr.rel (0) target = $region17
    $region16: #{tpu_custom_call.1} parent=1 // pred_region
      %s55 = ssub.s32 128, 128
      %56 = vsyncadd [#allocation10], %s55
      %s58 = sshll.u32 [#allocation9], 4
      %s59 = int_to_ptr.vmem [resolvable:$true] %s58
      %61 = dma.hbm_to_vmem [thread:$0]  %s3, 128, %s59, [#allocation10]
    $region17: #{tpu_custom_call.1} parent=1 // pred_fallthru
      _
    // Predicated region
    $region18: #{tpu_custom_call.1} parent=1 // pred_check
      _
    $region19: #{tpu_custom_call.1} parent=1 // pred_check_branch
      %63 = sbr.rel (0) target = $region21
    $region20: #{tpu_custom_call.1} parent=1 // pred_region
      %s65 = ssub.s32 1024, 1024
      %66 = vsyncadd [#allocation10], %s65
      %s67 = sshll.u32 [#allocation11], 4
      %s68 = int_to_ptr.vmem [resolvable:$true] %s67
      %73 = dma.hbm_to_vmem [thread:$0]  %s4, 1024, %s68, [#allocation10], 128, 128, 8
    $region21: #{tpu_custom_call.1} parent=1 // pred_fallthru
      _
    // Predicated region
    $region22: #{tpu_custom_call.1} parent=1 // pred_check
      _
    $region23: #{tpu_custom_call.1} parent=1 // pred_check_branch
      %75 = sbr.rel (0) target = $region25
    $region24: #{tpu_custom_call.1} parent=1 // pred_region
      _
    $region25: #{tpu_custom_call.1} parent=1 // pred_fallthru
      _
    // Predicated region
    $region26: #{tpu_custom_call.1} parent=1 // pred_check
      _
    $region27: #{tpu_custom_call.1} parent=1 // pred_check_branch
      %77 = sbr.rel (0) target = $region29
    $region28: #{tpu_custom_call.1} parent=1 // pred_region
      _
    $region29: #{tpu_custom_call.1} parent=1 // pred_fallthru
      _
    // Predicated region
    $region30: #{tpu_custom_call.1} parent=1 // pred_check
      _
    $region31: #{tpu_custom_call.1} parent=1 // pred_check_branch
      %79 = sbr.rel (0) target = $region33
    $region32: #{tpu_custom_call.1} parent=1 // pred_region
      _
    $region33: #{tpu_custom_call.1} parent=1 // pred_fallthru
      _
    // Predicated region
    $region34: #{tpu_custom_call.1} parent=1 // pred_check
      _
    $region35: #{tpu_custom_call.1} parent=1 // pred_check_branch
      %81 = sbr.rel (0) target = $region37
    $region36: #{tpu_custom_call.1} parent=1 // pred_region
      _
    $region37: #{tpu_custom_call.1} parent=1 // pred_fallthru
      _
    // Predicated region
    $region38: #{tpu_custom_call.1} parent=1 // pred_check
      _
    $region39: #{tpu_custom_call.1} parent=1 // pred_check_branch
      %83 = sbr.rel (0) target = $region41
    $region40: #{tpu_custom_call.1} parent=1 // pred_region
      %84 = dma.done [#allocation4], 128
    $region41: #{tpu_custom_call.1} parent=1 // pred_fallthru
      _
    // Predicated region
    $region42: #{tpu_custom_call.1} parent=1 // pred_check
      _
    $region43: #{tpu_custom_call.1} parent=1 // pred_check_branch
      %86 = sbr.rel (0) target = $region45
    $region44: #{tpu_custom_call.1} parent=1 // pred_region
      %87 = dma.done [#allocation7], 384
    $region45: #{tpu_custom_call.1} parent=1 // pred_fallthru
      _
    // Predicated region
    $region46: #{tpu_custom_call.1} parent=1 // pred_check
      _
    $region47: #{tpu_custom_call.1} parent=1 // pred_check_branch
      %89 = sbr.rel (0) target = $region49
    $region48: #{tpu_custom_call.1} parent=1 // pred_region
      %90 = dma.done [#allocation7], 384
    $region49: #{tpu_custom_call.1} parent=1 // pred_fallthru
      _
    // Predicated region
    $region50: #{tpu_custom_call.1} parent=1 // pred_check
      _
    $region51: #{tpu_custom_call.1} parent=1 // pred_check_branch
      %92 = sbr.rel (0) target = $region53
    $region52: #{tpu_custom_call.1} parent=1 // pred_region
      %93 = dma.done [#allocation10], 128
    $region53: #{tpu_custom_call.1} parent=1 // pred_fallthru
      _
    // Predicated region
    $region54: #{tpu_custom_call.1} parent=1 // pred_check
      _
    $region55: #{tpu_custom_call.1} parent=1 // pred_check_branch
      %95 = sbr.rel (0) target = $region57
    $region56: #{tpu_custom_call.1} parent=1 // pred_region
      %96 = dma.done [#allocation10], 1024
    $region57: #{tpu_custom_call.1} parent=1 // pred_fallthru
      _
    %vm97 = vcmask 261120
    %98 = vst.msk [vmem:[#allocation2] sm:$0xff] %vm97, 0.0
    %99 = vst.msk [vmem:[#allocation2 + $0x8] sm:$0xff] %vm97, 0.0
    %100 = vst.msk [vmem:[#allocation2 + $0x10] sm:$0xff] %vm97, 0.0
    %101 = vst.msk [vmem:[#allocation2 + $0x18] sm:$0xff] %vm97, 0.0
    %v102 = vld [vmem:[#allocation3] sm:$0xff]
    %103 = vst.msk [vmem:[#allocation2] sm:$0xff] %vm97, %v102
    %v104 = vld [vmem:[#allocation11] sm:$0xff]
    %v105 = vld [vmem:[#allocation11 + $0x8] sm:$0xff]
    %v106 = vld [vmem:[#allocation11 + $0x10] sm:$0xff]
    %v107 = vld [vmem:[#allocation11 + $0x18] sm:$0xff]
    %v108 = vld [vmem:[#allocation11 + $0x20] sm:$0xff]
    %v109 = vld [vmem:[#allocation11 + $0x28] sm:$0xff]
    %v110 = vld [vmem:[#allocation11 + $0x30] sm:$0xff]
    %v111 = vld [vmem:[#allocation11 + $0x38] sm:$0xff]
    %v112 = vld [vmem:[%s5] sm:$0x1]
    %v114 = vlaneseq
    %v115 = vshrl.u32 %v114, 7
    %v116 = vsub.s32 0, %v115
    %v117 = vrot.slane %v112, %v116
    %v119 = vld [vmem:[#allocation2] sm:$0xff]
    %v120 = vld [vmem:[#allocation2 + $0x8] sm:$0xff]
    %v121 = vld [vmem:[#allocation2 + $0x10] sm:$0xff]
    %v122 = vld [vmem:[#allocation2 + $0x18] sm:$0xff]
    %v123 = vld [vmem:[#allocation6] sm:$0xff]
    %v124 = vld [vmem:[#allocation8] sm:$0xff]
    %v126 = vsel %vm97, %v123, 0
    %128 = vmatprep.subr.mxu0 0.0
    %129 = vmatpush1.msra.mxu0 0.0
    %130 = vmatprep.subr.mxu0 0.0
    %131 = vmatpush1.msra.mxu0 0.0
    %132 = vmatprep.subr.mxu0 0.0
    %133 = vmatpush1.msra.mxu0 0.0
    %134 = vmatprep.subr.mxu0 0.0
    %135 = vmatpush1.msra.mxu0 0.0
    %136 = vmatprep.subr.mxu0 0.0
    %137 = vmatpush1.msra.mxu0 0.0
    %138 = vmatprep.subr.mxu0 0.0
    %139 = vmatpush1.msra.mxu0 0.0
    %140 = vmatprep.subr.mxu0 0.0
    %141 = vmatpush1.msra.mxu0 0.0
    %142 = vmatprep.subr.mxu0 0.0
    %143 = vmatpush1.msra.mxu0 0.0
    %144 = vmatprep.subr.mxu0 0.0
    %145 = vmatpush1.msra.mxu0 0.0
    %146 = vmatprep.subr.mxu0 0.0
    %147 = vmatpush1.msra.mxu0 0.0
    %148 = vmatprep.subr.mxu0 0.0
    %149 = vmatpush1.msra.mxu0 0.0
    %150 = vmatprep.subr.mxu0 0.0
    %151 = vmatpush1.msra.mxu0 0.0
    %152 = vmatprep.subr.mxu0 0.0
    %153 = vmatpush1.msra.mxu0 %v122
    %154 = vmatprep.subr.mxu0 0.0
    %155 = vmatpush1.msra.mxu0 %v121
    %156 = vmatprep.subr.mxu0 0.0
    %157 = vmatpush1.msra.mxu0 %v120
    %158 = vmatprep.subr.mxu0 0.0
    %159 = vmatpush1.msra.mxu0 %v119
    %160 = vmatprep.subr.mxu0 0.0
    %161 = vmatpush2.msra.mxu0 0.0
    %162 = vmatprep.subr.mxu0 0.0
    %163 = vmatpush2.msra.mxu0 0.0
    %164 = vmatprep.subr.mxu0 0.0
    %165 = vmatpush2.msra.mxu0 0.0
    %166 = vmatprep.subr.mxu0 0.0
    %167 = vmatpush2.msra.mxu0 0.0
    %168 = vmatprep.subr.mxu0 0.0
    %169 = vmatpush2.msra.mxu0 0.0
    %170 = vmatprep.subr.mxu0 0.0
    %171 = vmatpush2.msra.mxu0 0.0
    %172 = vmatprep.subr.mxu0 0.0
    %173 = vmatpush2.msra.mxu0 0.0
    %174 = vmatprep.subr.mxu0 0.0
    %175 = vmatpush2.msra.mxu0 0.0
    %176 = vmatprep.subr.mxu0 0.0
    %177 = vmatpush2.msra.mxu0 0.0
    %178 = vmatprep.subr.mxu0 0.0
    %179 = vmatpush2.msra.mxu0 0.0
    %180 = vmatprep.subr.mxu0 0.0
    %181 = vmatpush2.msra.mxu0 0.0
    %182 = vmatprep.subr.mxu0 0.0
    %183 = vmatpush2.msra.mxu0 0.0
    %184 = vmatprep.subr.mxu0 0.0
    %185 = vmatpush2.msra.mxu0 0.0
    %186 = vmatprep.subr.mxu0 0.0
    %187 = vmatpush2.msra.mxu0 0.0
    %188 = vmatprep.subr.mxu0 0.0
    %189 = vmatpush2.msra.mxu0 0.0
    %190 = vmatprep.subr.mxu0 0.0
    %191 = vmatpush2.msra.mxu0 0.0
    %192 = vmatprep.mubr.f32.mxu0 0.0
    %193 = vmatmul.mubr.f32.gmra.mxu0 %v126
    %v194 = vpop.f32.mrf.mxu0
    %v195 = vadd.f32 0.0, %v194
    %v196 = vpop.f32.mrf.mxu0
    %197 = vdwg.mxu0
    %v199 = vsel %vm97, %v124, 0
    %201 = vmatprep.subr.mxu0 0.0
    %202 = vmatpush1.msra.mxu0 0.0
    %203 = vmatprep.subr.mxu0 0.0
    %204 = vmatpush1.msra.mxu0 0.0
    %205 = vmatprep.subr.mxu0 0.0
    %206 = vmatpush1.msra.mxu0 0.0
    %207 = vmatprep.subr.mxu0 0.0
    %208 = vmatpush1.msra.mxu0 0.0
    %209 = vmatprep.subr.mxu0 0.0
    %210 = vmatpush1.msra.mxu0 0.0
    %211 = vmatprep.subr.mxu0 0.0
    %212 = vmatpush1.msra.mxu0 0.0
    %213 = vmatprep.subr.mxu0 0.0
    %214 = vmatpush1.msra.mxu0 0.0
    %215 = vmatprep.subr.mxu0 0.0
    %216 = vmatpush1.msra.mxu0 0.0
    %217 = vmatprep.subr.mxu0 0.0
    %218 = vmatpush1.msra.mxu0 0.0
    %219 = vmatprep.subr.mxu0 0.0
    %220 = vmatpush1.msra.mxu0 0.0
    %221 = vmatprep.subr.mxu0 0.0
    %222 = vmatpush1.msra.mxu0 0.0
    %223 = vmatprep.subr.mxu0 0.0
    %224 = vmatpush1.msra.mxu0 0.0
    %225 = vmatprep.subr.mxu0 0.0
    %226 = vmatpush1.msra.mxu0 %v122
    %227 = vmatprep.subr.mxu0 0.0
    %228 = vmatpush1.msra.mxu0 %v121
    %229 = vmatprep.subr.mxu0 0.0
    %230 = vmatpush1.msra.mxu0 %v120
    %231 = vmatprep.subr.mxu0 0.0
    %232 = vmatpush1.msra.mxu0 %v119
    %233 = vmatprep.subr.mxu0 0.0
    %234 = vmatpush2.msra.mxu0 0.0
    %235 = vmatprep.subr.mxu0 0.0
    %236 = vmatpush2.msra.mxu0 0.0
    %237 = vmatprep.subr.mxu0 0.0
    %238 = vmatpush2.msra.mxu0 0.0
    %239 = vmatprep.subr.mxu0 0.0
    %240 = vmatpush2.msra.mxu0 0.0
    %241 = vmatprep.subr.mxu0 0.0
    %242 = vmatpush2.msra.mxu0 0.0
    %243 = vmatprep.subr.mxu0 0.0
    %244 = vmatpush2.msra.mxu0 0.0
    %245 = vmatprep.subr.mxu0 0.0
    %246 = vmatpush2.msra.mxu0 0.0
    %247 = vmatprep.subr.mxu0 0.0
    %248 = vmatpush2.msra.mxu0 0.0
    %249 = vmatprep.subr.mxu0 0.0
    %250 = vmatpush2.msra.mxu0 0.0
    %251 = vmatprep.subr.mxu0 0.0
    %252 = vmatpush2.msra.mxu0 0.0
    %253 = vmatprep.subr.mxu0 0.0
    %254 = vmatpush2.msra.mxu0 0.0
    %255 = vmatprep.subr.mxu0 0.0
    %256 = vmatpush2.msra.mxu0 0.0
    %257 = vmatprep.subr.mxu0 0.0
    %258 = vmatpush2.msra.mxu0 0.0
    %259 = vmatprep.subr.mxu0 0.0
    %260 = vmatpush2.msra.mxu0 0.0
    %261 = vmatprep.subr.mxu0 0.0
    %262 = vmatpush2.msra.mxu0 0.0
    %263 = vmatprep.subr.mxu0 0.0
    %264 = vmatpush2.msra.mxu0 0.0
    %265 = vmatprep.mubr.f32.mxu0 0.0
    %266 = vmatmul.mubr.f32.gmra.mxu0 %v199
    %v267 = vpop.f32.mrf.mxu0
    %v268 = vadd.f32 0.0, %v267
    %v269 = vpop.f32.mrf.mxu0
    %270 = vdwg.mxu0
    %272 = vrot.lane.b32.xlu0 %v195, 32
    %v273 = vpop.permute.xlu0 %272
    %v275 = vsel %vm97, %v268, %v273
    %vm276 = vcmask 523264
    %v278 = vsel %vm276, %v275, 0
    %280 = vmatprep.subr.mxu0 0.0
    %281 = vmatpush1.msra.mxu0 0.0
    %282 = vmatprep.subr.mxu0 0.0
    %283 = vmatpush1.msra.mxu0 0.0
    %284 = vmatprep.subr.mxu0 0.0
    %285 = vmatpush1.msra.mxu0 0.0
    %286 = vmatprep.subr.mxu0 0.0
    %287 = vmatpush1.msra.mxu0 0.0
    %288 = vmatprep.subr.mxu0 0.0
    %289 = vmatpush1.msra.mxu0 0.0
    %290 = vmatprep.subr.mxu0 0.0
    %291 = vmatpush1.msra.mxu0 0.0
    %292 = vmatprep.subr.mxu0 0.0
    %293 = vmatpush1.msra.mxu0 0.0
    %294 = vmatprep.subr.mxu0 0.0
    %295 = vmatpush1.msra.mxu0 0.0
    %296 = vmatprep.subr.mxu0 0.0
    %297 = vmatpush1.msra.mxu0 %v111
    %298 = vmatprep.subr.mxu0 0.0
    %299 = vmatpush1.msra.mxu0 %v110
    %300 = vmatprep.subr.mxu0 0.0
    %301 = vmatpush1.msra.mxu0 %v109
    %302 = vmatprep.subr.mxu0 0.0
    %303 = vmatpush1.msra.mxu0 %v108
    %304 = vmatprep.subr.mxu0 0.0
    %305 = vmatpush1.msra.mxu0 %v107
    %306 = vmatprep.subr.mxu0 0.0
    %307 = vmatpush1.msra.mxu0 %v106
    %308 = vmatprep.subr.mxu0 0.0
    %309 = vmatpush1.msra.mxu0 %v105
    %310 = vmatprep.subr.mxu0 0.0
    %311 = vmatpush1.msra.mxu0 %v104
    %312 = vmatprep.subr.mxu0 0.0
    %313 = vmatpush2.msra.mxu0 0.0
    %314 = vmatprep.subr.mxu0 0.0
    %315 = vmatpush2.msra.mxu0 0.0
    %316 = vmatprep.subr.mxu0 0.0
    %317 = vmatpush2.msra.mxu0 0.0
    %318 = vmatprep.subr.mxu0 0.0
    %319 = vmatpush2.msra.mxu0 0.0
    %320 = vmatprep.subr.mxu0 0.0
    %321 = vmatpush2.msra.mxu0 0.0
    %322 = vmatprep.subr.mxu0 0.0
    %323 = vmatpush2.msra.mxu0 0.0
    %324 = vmatprep.subr.mxu0 0.0
    %325 = vmatpush2.msra.mxu0 0.0
    %326 = vmatprep.subr.mxu0 0.0
    %327 = vmatpush2.msra.mxu0 0.0
    %328 = vmatprep.subr.mxu0 0.0
    %329 = vmatpush2.msra.mxu0 0.0
    %330 = vmatprep.subr.mxu0 0.0
    %331 = vmatpush2.msra.mxu0 0.0
    %332 = vmatprep.subr.mxu0 0.0
    %333 = vmatpush2.msra.mxu0 0.0
    %334 = vmatprep.subr.mxu0 0.0
    %335 = vmatpush2.msra.mxu0 0.0
    %336 = vmatprep.subr.mxu0 0.0
    %337 = vmatpush2.msra.mxu0 0.0
    %338 = vmatprep.subr.mxu0 0.0
    %339 = vmatpush2.msra.mxu0 0.0
    %340 = vmatprep.subr.mxu0 0.0
    %341 = vmatpush2.msra.mxu0 0.0
    %342 = vmatprep.subr.mxu0 0.0
    %343 = vmatpush2.msra.mxu0 0.0
    %344 = vmatprep.mubr.f32.mxu0 0.0
    %345 = vmatmul.mubr.f32.gmra.mxu0 %v278
    %v346 = vpop.f32.mrf.mxu0
    %v347 = vadd.f32 %v117, %v346
    %v348 = vpop.f32.mrf.mxu0
    %349 = vdwg.mxu0
    %v350 = vxor.u32 %v347, 2147483648
    %v351 = vmul.f32 %v350, 1.442695
    %v352 = vpow.pop %v351
    %v353 = vadd.f32 %v352, 1.0
    %v354 = vrcp.pop %v353
    %v355 = vmul.f32 1.0, %v354
    %357 = vrot.lane.b32.xlu0 %v347, 32
    %v358 = vpop.permute.xlu0 %357
    %v360 = vmul.f32 %v355, %v358
    %362 = vrot.lane.b32.xlu0 %v360, 64
    %v363 = vpop.permute.xlu0 %362
    %v365 = vadd.f32 %v347, %v363
    %v366 = vtanh.pop %v365
    %v367 = vsub.f32 1.0, %v355
    %369 = vrot.lane.b32.xlu0 %v366, 96
    %v370 = vpop.permute.xlu0 %369
    %v372 = vmul.f32 %v367, %v370
    %v373 = vmul.f32 %v355, %v273
    %v374 = vadd.f32 %v372, %v373
    %376 = vrot.lane.b32.xlu0 %v374, 96
    %v377 = vpop.permute.xlu0 %376
    %379 = vst.msk [vmem:[#allocation2 + $0x8] sm:$0xff] %vm97, %v377
    %v380 = vld [vmem:[#allocation2] sm:$0xff]
    %v381 = vld [vmem:[#allocation2 + $0x8] sm:$0xff]
    %v382 = vld [vmem:[#allocation2 + $0x10] sm:$0xff]
    %v383 = vld [vmem:[#allocation2 + $0x18] sm:$0xff]
    %v384 = vld [vmem:[#allocation6 + $0x8] sm:$0xff]
    %v385 = vld [vmem:[#allocation8 + $0x8] sm:$0xff]
    %v387 = vsel %vm97, %v384, 0
    %389 = vmatprep.subr.mxu0 0.0
    %390 = vmatpush1.msra.mxu0 0.0
    %391 = vmatprep.subr.mxu0 0.0
    %392 = vmatpush1.msra.mxu0 0.0
    %393 = vmatprep.subr.mxu0 0.0
    %394 = vmatpush1.msra.mxu0 0.0
    %395 = vmatprep.subr.mxu0 0.0
    %396 = vmatpush1.msra.mxu0 0.0
    %397 = vmatprep.subr.mxu0 0.0
    %398 = vmatpush1.msra.mxu0 0.0
    %399 = vmatprep.subr.mxu0 0.0
    %400 = vmatpush1.msra.mxu0 0.0
    %401 = vmatprep.subr.mxu0 0.0
    %402 = vmatpush1.msra.mxu0 0.0
    %403 = vmatprep.subr.mxu0 0.0
    %404 = vmatpush1.msra.mxu0 0.0
    %405 = vmatprep.subr.mxu0 0.0
    %406 = vmatpush1.msra.mxu0 0.0
    %407 = vmatprep.subr.mxu0 0.0
    %408 = vmatpush1.msra.mxu0 0.0
    %409 = vmatprep.subr.mxu0 0.0
    %410 = vmatpush1.msra.mxu0 0.0
    %411 = vmatprep.subr.mxu0 0.0
    %412 = vmatpush1.msra.mxu0 0.0
    %413 = vmatprep.subr.mxu0 0.0
    %414 = vmatpush1.msra.mxu0 %v383
    %415 = vmatprep.subr.mxu0 0.0
    %416 = vmatpush1.msra.mxu0 %v382
    %417 = vmatprep.subr.mxu0 0.0
    %418 = vmatpush1.msra.mxu0 %v381
    %419 = vmatprep.subr.mxu0 0.0
    %420 = vmatpush1.msra.mxu0 %v380
    %421 = vmatprep.subr.mxu0 0.0
    %422 = vmatpush2.msra.mxu0 0.0
    %423 = vmatprep.subr.mxu0 0.0
    %424 = vmatpush2.msra.mxu0 0.0
    %425 = vmatprep.subr.mxu0 0.0
    %426 = vmatpush2.msra.mxu0 0.0
    %427 = vmatprep.subr.mxu0 0.0
    %428 = vmatpush2.msra.mxu0 0.0
    %429 = vmatprep.subr.mxu0 0.0
    %430 = vmatpush2.msra.mxu0 0.0
    %431 = vmatprep.subr.mxu0 0.0
    %432 = vmatpush2.msra.mxu0 0.0
    %433 = vmatprep.subr.mxu0 0.0
    %434 = vmatpush2.msra.mxu0 0.0
    %435 = vmatprep.subr.mxu0 0.0
    %436 = vmatpush2.msra.mxu0 0.0
    %437 = vmatprep.subr.mxu0 0.0
    %438 = vmatpush2.msra.mxu0 0.0
    %439 = vmatprep.subr.mxu0 0.0
    %440 = vmatpush2.msra.mxu0 0.0
    %441 = vmatprep.subr.mxu0 0.0
    %442 = vmatpush2.msra.mxu0 0.0
    %443 = vmatprep.subr.mxu0 0.0
    %444 = vmatpush2.msra.mxu0 0.0
    %445 = vmatprep.subr.mxu0 0.0
    %446 = vmatpush2.msra.mxu0 0.0
    %447 = vmatprep.subr.mxu0 0.0
    %448 = vmatpush2.msra.mxu0 0.0
    %449 = vmatprep.subr.mxu0 0.0
    %450 = vmatpush2.msra.mxu0 0.0
    %451 = vmatprep.subr.mxu0 0.0
    %452 = vmatpush2.msra.mxu0 0.0
    %453 = vmatprep.mubr.f32.mxu0 0.0
    %454 = vmatmul.mubr.f32.gmra.mxu0 %v387
    %v455 = vpop.f32.mrf.mxu0
    %v456 = vadd.f32 0.0, %v455
    %v457 = vpop.f32.mrf.mxu0
    %458 = vdwg.mxu0
    %v460 = vsel %vm97, %v385, 0
    %462 = vmatprep.subr.mxu0 0.0
    %463 = vmatpush1.msra.mxu0 0.0
    %464 = vmatprep.subr.mxu0 0.0
    %465 = vmatpush1.msra.mxu0 0.0
    %466 = vmatprep.subr.mxu0 0.0
    %467 = vmatpush1.msra.mxu0 0.0
    %468 = vmatprep.subr.mxu0 0.0
    %469 = vmatpush1.msra.mxu0 0.0
    %470 = vmatprep.subr.mxu0 0.0
    %471 = vmatpush1.msra.mxu0 0.0
    %472 = vmatprep.subr.mxu0 0.0
    %473 = vmatpush1.msra.mxu0 0.0
    %474 = vmatprep.subr.mxu0 0.0
    %475 = vmatpush1.msra.mxu0 0.0
    %476 = vmatprep.subr.mxu0 0.0
    %477 = vmatpush1.msra.mxu0 0.0
    %478 = vmatprep.subr.mxu0 0.0
    %479 = vmatpush1.msra.mxu0 0.0
    %480 = vmatprep.subr.mxu0 0.0
    %481 = vmatpush1.msra.mxu0 0.0
    %482 = vmatprep.subr.mxu0 0.0
    %483 = vmatpush1.msra.mxu0 0.0
    %484 = vmatprep.subr.mxu0 0.0
    %485 = vmatpush1.msra.mxu0 0.0
    %486 = vmatprep.subr.mxu0 0.0
    %487 = vmatpush1.msra.mxu0 %v383
    %488 = vmatprep.subr.mxu0 0.0
    %489 = vmatpush1.msra.mxu0 %v382
    %490 = vmatprep.subr.mxu0 0.0
    %491 = vmatpush1.msra.mxu0 %v381
    %492 = vmatprep.subr.mxu0 0.0
    %493 = vmatpush1.msra.mxu0 %v380
    %494 = vmatprep.subr.mxu0 0.0
    %495 = vmatpush2.msra.mxu0 0.0
    %496 = vmatprep.subr.mxu0 0.0
    %497 = vmatpush2.msra.mxu0 0.0
    %498 = vmatprep.subr.mxu0 0.0
    %499 = vmatpush2.msra.mxu0 0.0
    %500 = vmatprep.subr.mxu0 0.0
    %501 = vmatpush2.msra.mxu0 0.0
    %502 = vmatprep.subr.mxu0 0.0
    %503 = vmatpush2.msra.mxu0 0.0
    %504 = vmatprep.subr.mxu0 0.0
    %505 = vmatpush2.msra.mxu0 0.0
    %506 = vmatprep.subr.mxu0 0.0
    %507 = vmatpush2.msra.mxu0 0.0
    %508 = vmatprep.subr.mxu0 0.0
    %509 = vmatpush2.msra.mxu0 0.0
    %510 = vmatprep.subr.mxu0 0.0
    %511 = vmatpush2.msra.mxu0 0.0
    %512 = vmatprep.subr.mxu0 0.0
    %513 = vmatpush2.msra.mxu0 0.0
    %514 = vmatprep.subr.mxu0 0.0
    %515 = vmatpush2.msra.mxu0 0.0
    %516 = vmatprep.subr.mxu0 0.0
    %517 = vmatpush2.msra.mxu0 0.0
    %518 = vmatprep.subr.mxu0 0.0
    %519 = vmatpush2.msra.mxu0 0.0
    %520 = vmatprep.subr.mxu0 0.0
    %521 = vmatpush2.msra.mxu0 0.0
    %522 = vmatprep.subr.mxu0 0.0
    %523 = vmatpush2.msra.mxu0 0.0
    %524 = vmatprep.subr.mxu0 0.0
    %525 = vmatpush2.msra.mxu0 0.0
    %526 = vmatprep.mubr.f32.mxu0 0.0
    %527 = vmatmul.mubr.f32.gmra.mxu0 %v460
    %v528 = vpop.f32.mrf.mxu0
    %v529 = vadd.f32 0.0, %v528
    %v530 = vpop.f32.mrf.mxu0
    %531 = vdwg.mxu0
    %533 = vrot.lane.b32.xlu0 %v456, 32
    %v534 = vpop.permute.xlu0 %533
    %v536 = vsel %vm97, %v529, %v534
    %v538 = vsel %vm276, %v536, 0
    %540 = vmatprep.subr.mxu0 0.0
    %541 = vmatpush1.msra.mxu0 0.0
    %542 = vmatprep.subr.mxu0 0.0
    %543 = vmatpush1.msra.mxu0 0.0
    %544 = vmatprep.subr.mxu0 0.0
    %545 = vmatpush1.msra.mxu0 0.0
    %546 = vmatprep.subr.mxu0 0.0
    %547 = vmatpush1.msra.mxu0 0.0
    %548 = vmatprep.subr.mxu0 0.0
    %549 = vmatpush1.msra.mxu0 0.0
    %550 = vmatprep.subr.mxu0 0.0
    %551 = vmatpush1.msra.mxu0 0.0
    %552 = vmatprep.subr.mxu0 0.0
    %553 = vmatpush1.msra.mxu0 0.0
    %554 = vmatprep.subr.mxu0 0.0
    %555 = vmatpush1.msra.mxu0 0.0
    %556 = vmatprep.subr.mxu0 0.0
    %557 = vmatpush1.msra.mxu0 %v111
    %558 = vmatprep.subr.mxu0 0.0
    %559 = vmatpush1.msra.mxu0 %v110
    %560 = vmatprep.subr.mxu0 0.0
    %561 = vmatpush1.msra.mxu0 %v109
    %562 = vmatprep.subr.mxu0 0.0
    %563 = vmatpush1.msra.mxu0 %v108
    %564 = vmatprep.subr.mxu0 0.0
    %565 = vmatpush1.msra.mxu0 %v107
    %566 = vmatprep.subr.mxu0 0.0
    %567 = vmatpush1.msra.mxu0 %v106
    %568 = vmatprep.subr.mxu0 0.0
    %569 = vmatpush1.msra.mxu0 %v105
    %570 = vmatprep.subr.mxu0 0.0
    %571 = vmatpush1.msra.mxu0 %v104
    %572 = vmatprep.subr.mxu0 0.0
    %573 = vmatpush2.msra.mxu0 0.0
    %574 = vmatprep.subr.mxu0 0.0
    %575 = vmatpush2.msra.mxu0 0.0
    %576 = vmatprep.subr.mxu0 0.0
    %577 = vmatpush2.msra.mxu0 0.0
    %578 = vmatprep.subr.mxu0 0.0
    %579 = vmatpush2.msra.mxu0 0.0
    %580 = vmatprep.subr.mxu0 0.0
    %581 = vmatpush2.msra.mxu0 0.0
    %582 = vmatprep.subr.mxu0 0.0
    %583 = vmatpush2.msra.mxu0 0.0
    %584 = vmatprep.subr.mxu0 0.0
    %585 = vmatpush2.msra.mxu0 0.0
    %586 = vmatprep.subr.mxu0 0.0
    %587 = vmatpush2.msra.mxu0 0.0
    %588 = vmatprep.subr.mxu0 0.0
    %589 = vmatpush2.msra.mxu0 0.0
    %590 = vmatprep.subr.mxu0 0.0
    %591 = vmatpush2.msra.mxu0 0.0
    %592 = vmatprep.subr.mxu0 0.0
    %593 = vmatpush2.msra.mxu0 0.0
    %594 = vmatprep.subr.mxu0 0.0
    %595 = vmatpush2.msra.mxu0 0.0
    %596 = vmatprep.subr.mxu0 0.0
    %597 = vmatpush2.msra.mxu0 0.0
    %598 = vmatprep.subr.mxu0 0.0
    %599 = vmatpush2.msra.mxu0 0.0
    %600 = vmatprep.subr.mxu0 0.0
    %601 = vmatpush2.msra.mxu0 0.0
    %602 = vmatprep.subr.mxu0 0.0
    %603 = vmatpush2.msra.mxu0 0.0
    %604 = vmatprep.mubr.f32.mxu0 0.0
    %605 = vmatmul.mubr.f32.gmra.mxu0 %v538
    %v606 = vpop.f32.mrf.mxu0
    %v607 = vadd.f32 %v117, %v606
    %v608 = vpop.f32.mrf.mxu0
    %609 = vdwg.mxu0
    %v610 = vxor.u32 %v607, 2147483648
    %v611 = vmul.f32 %v610, 1.442695
    %v612 = vpow.pop %v611
    %v613 = vadd.f32 %v612, 1.0
    %v614 = vrcp.pop %v613
    %v615 = vmul.f32 1.0, %v614
    %617 = vrot.lane.b32.xlu0 %v607, 32
    %v618 = vpop.permute.xlu0 %617
    %v620 = vmul.f32 %v615, %v618
    %622 = vrot.lane.b32.xlu0 %v620, 64
    %v623 = vpop.permute.xlu0 %622
    %v625 = vadd.f32 %v607, %v623
    %v626 = vtanh.pop %v625
    %v627 = vsub.f32 1.0, %v615
    %629 = vrot.lane.b32.xlu0 %v626, 96
    %v630 = vpop.permute.xlu0 %629
    %v632 = vmul.f32 %v627, %v630
    %v633 = vmul.f32 %v615, %v534
    %v634 = vadd.f32 %v632, %v633
    %636 = vrot.lane.b32.xlu0 %v634, 96
    %v637 = vpop.permute.xlu0 %636
    %639 = vst.msk [vmem:[#allocation2 + $0x10] sm:$0xff] %vm97, %v637
    %v640 = vld [vmem:[#allocation2] sm:$0xff]
    %v641 = vld [vmem:[#allocation2 + $0x8] sm:$0xff]
    %v642 = vld [vmem:[#allocation2 + $0x10] sm:$0xff]
    %v643 = vld [vmem:[#allocation2 + $0x18] sm:$0xff]
    %v644 = vld [vmem:[#allocation6 + $0x10] sm:$0xff]
    %v645 = vld [vmem:[#allocation8 + $0x10] sm:$0xff]
    %v647 = vsel %vm97, %v644, 0
    %649 = vmatprep.subr.mxu0 0.0
    %650 = vmatpush1.msra.mxu0 0.0
    %651 = vmatprep.subr.mxu0 0.0
    %652 = vmatpush1.msra.mxu0 0.0
    %653 = vmatprep.subr.mxu0 0.0
    %654 = vmatpush1.msra.mxu0 0.0
    %655 = vmatprep.subr.mxu0 0.0
    %656 = vmatpush1.msra.mxu0 0.0
    %657 = vmatprep.subr.mxu0 0.0
    %658 = vmatpush1.msra.mxu0 0.0
    %659 = vmatprep.subr.mxu0 0.0
    %660 = vmatpush1.msra.mxu0 0.0
    %661 = vmatprep.subr.mxu0 0.0
    %662 = vmatpush1.msra.mxu0 0.0
    %663 = vmatprep.subr.mxu0 0.0
    %664 = vmatpush1.msra.mxu0 0.0
    %665 = vmatprep.subr.mxu0 0.0
    %666 = vmatpush1.msra.mxu0 0.0
    %667 = vmatprep.subr.mxu0 0.0
    %668 = vmatpush1.msra.mxu0 0.0
    %669 = vmatprep.subr.mxu0 0.0
    %670 = vmatpush1.msra.mxu0 0.0
    %671 = vmatprep.subr.mxu0 0.0
    %672 = vmatpush1.msra.mxu0 0.0
    %673 = vmatprep.subr.mxu0 0.0
    %674 = vmatpush1.msra.mxu0 %v643
    %675 = vmatprep.subr.mxu0 0.0
    %676 = vmatpush1.msra.mxu0 %v642
    %677 = vmatprep.subr.mxu0 0.0
    %678 = vmatpush1.msra.mxu0 %v641
    %679 = vmatprep.subr.mxu0 0.0
    %680 = vmatpush1.msra.mxu0 %v640
    %681 = vmatprep.subr.mxu0 0.0
    %682 = vmatpush2.msra.mxu0 0.0
    %683 = vmatprep.subr.mxu0 0.0
    %684 = vmatpush2.msra.mxu0 0.0
    %685 = vmatprep.subr.mxu0 0.0
    %686 = vmatpush2.msra.mxu0 0.0
    %687 = vmatprep.subr.mxu0 0.0
    %688 = vmatpush2.msra.mxu0 0.0
    %689 = vmatprep.subr.mxu0 0.0
    %690 = vmatpush2.msra.mxu0 0.0
    %691 = vmatprep.subr.mxu0 0.0
    %692 = vmatpush2.msra.mxu0 0.0
    %693 = vmatprep.subr.mxu0 0.0
    %694 = vmatpush2.msra.mxu0 0.0
    %695 = vmatprep.subr.mxu0 0.0
    %696 = vmatpush2.msra.mxu0 0.0
    %697 = vmatprep.subr.mxu0 0.0
    %698 = vmatpush2.msra.mxu0 0.0
    %699 = vmatprep.subr.mxu0 0.0
    %700 = vmatpush2.msra.mxu0 0.0
    %701 = vmatprep.subr.mxu0 0.0
    %702 = vmatpush2.msra.mxu0 0.0
    %703 = vmatprep.subr.mxu0 0.0
    %704 = vmatpush2.msra.mxu0 0.0
    %705 = vmatprep.subr.mxu0 0.0
    %706 = vmatpush2.msra.mxu0 0.0
    %707 = vmatprep.subr.mxu0 0.0
    %708 = vmatpush2.msra.mxu0 0.0
    %709 = vmatprep.subr.mxu0 0.0
    %710 = vmatpush2.msra.mxu0 0.0
    %711 = vmatprep.subr.mxu0 0.0
    %712 = vmatpush2.msra.mxu0 0.0
    %713 = vmatprep.mubr.f32.mxu0 0.0
    %714 = vmatmul.mubr.f32.gmra.mxu0 %v647
    %v715 = vpop.f32.mrf.mxu0
    %v716 = vadd.f32 0.0, %v715
    %v717 = vpop.f32.mrf.mxu0
    %718 = vdwg.mxu0
    %v720 = vsel %vm97, %v645, 0
    %722 = vmatprep.subr.mxu0 0.0
    %723 = vmatpush1.msra.mxu0 0.0
    %724 = vmatprep.subr.mxu0 0.0
    %725 = vmatpush1.msra.mxu0 0.0
    %726 = vmatprep.subr.mxu0 0.0
    %727 = vmatpush1.msra.mxu0 0.0
    %728 = vmatprep.subr.mxu0 0.0
    %729 = vmatpush1.msra.mxu0 0.0
    %730 = vmatprep.subr.mxu0 0.0
    %731 = vmatpush1.msra.mxu0 0.0
    %732 = vmatprep.subr.mxu0 0.0
    %733 = vmatpush1.msra.mxu0 0.0
    %734 = vmatprep.subr.mxu0 0.0
    %735 = vmatpush1.msra.mxu0 0.0
    %736 = vmatprep.subr.mxu0 0.0
    %737 = vmatpush1.msra.mxu0 0.0
    %738 = vmatprep.subr.mxu0 0.0
    %739 = vmatpush1.msra.mxu0 0.0
    %740 = vmatprep.subr.mxu0 0.0
    %741 = vmatpush1.msra.mxu0 0.0
    %742 = vmatprep.subr.mxu0 0.0
    %743 = vmatpush1.msra.mxu0 0.0
    %744 = vmatprep.subr.mxu0 0.0
    %745 = vmatpush1.msra.mxu0 0.0
    %746 = vmatprep.subr.mxu0 0.0
    %747 = vmatpush1.msra.mxu0 %v643
    %748 = vmatprep.subr.mxu0 0.0
    %749 = vmatpush1.msra.mxu0 %v642
    %750 = vmatprep.subr.mxu0 0.0
    %751 = vmatpush1.msra.mxu0 %v641
    %752 = vmatprep.subr.mxu0 0.0
    %753 = vmatpush1.msra.mxu0 %v640
    %754 = vmatprep.subr.mxu0 0.0
    %755 = vmatpush2.msra.mxu0 0.0
    %756 = vmatprep.subr.mxu0 0.0
    %757 = vmatpush2.msra.mxu0 0.0
    %758 = vmatprep.subr.mxu0 0.0
    %759 = vmatpush2.msra.mxu0 0.0
    %760 = vmatprep.subr.mxu0 0.0
    %761 = vmatpush2.msra.mxu0 0.0
    %762 = vmatprep.subr.mxu0 0.0
    %763 = vmatpush2.msra.mxu0 0.0
    %764 = vmatprep.subr.mxu0 0.0
    %765 = vmatpush2.msra.mxu0 0.0
    %766 = vmatprep.subr.mxu0 0.0
    %767 = vmatpush2.msra.mxu0 0.0
    %768 = vmatprep.subr.mxu0 0.0
    %769 = vmatpush2.msra.mxu0 0.0
    %770 = vmatprep.subr.mxu0 0.0
    %771 = vmatpush2.msra.mxu0 0.0
    %772 = vmatprep.subr.mxu0 0.0
    %773 = vmatpush2.msra.mxu0 0.0
    %774 = vmatprep.subr.mxu0 0.0
    %775 = vmatpush2.msra.mxu0 0.0
    %776 = vmatprep.subr.mxu0 0.0
    %777 = vmatpush2.msra.mxu0 0.0
    %778 = vmatprep.subr.mxu0 0.0
    %779 = vmatpush2.msra.mxu0 0.0
    %780 = vmatprep.subr.mxu0 0.0
    %781 = vmatpush2.msra.mxu0 0.0
    %782 = vmatprep.subr.mxu0 0.0
    %783 = vmatpush2.msra.mxu0 0.0
    %784 = vmatprep.subr.mxu0 0.0
    %785 = vmatpush2.msra.mxu0 0.0
    %786 = vmatprep.mubr.f32.mxu0 0.0
    %787 = vmatmul.mubr.f32.gmra.mxu0 %v720
    %v788 = vpop.f32.mrf.mxu0
    %v789 = vadd.f32 0.0, %v788
    %v790 = vpop.f32.mrf.mxu0
    %791 = vdwg.mxu0
    %793 = vrot.lane.b32.xlu0 %v716, 32
    %v794 = vpop.permute.xlu0 %793
    %v796 = vsel %vm97, %v789, %v794
    %v798 = vsel %vm276, %v796, 0
    %800 = vmatprep.subr.mxu0 0.0
    %801 = vmatpush1.msra.mxu0 0.0
    %802 = vmatprep.subr.mxu0 0.0
    %803 = vmatpush1.msra.mxu0 0.0
    %804 = vmatprep.subr.mxu0 0.0
    %805 = vmatpush1.msra.mxu0 0.0
    %806 = vmatprep.subr.mxu0 0.0
    %807 = vmatpush1.msra.mxu0 0.0
    %808 = vmatprep.subr.mxu0 0.0
    %809 = vmatpush1.msra.mxu0 0.0
    %810 = vmatprep.subr.mxu0 0.0
    %811 = vmatpush1.msra.mxu0 0.0
    %812 = vmatprep.subr.mxu0 0.0
    %813 = vmatpush1.msra.mxu0 0.0
    %814 = vmatprep.subr.mxu0 0.0
    %815 = vmatpush1.msra.mxu0 0.0
    %816 = vmatprep.subr.mxu0 0.0
    %817 = vmatpush1.msra.mxu0 %v111
    %818 = vmatprep.subr.mxu0 0.0
    %819 = vmatpush1.msra.mxu0 %v110
    %820 = vmatprep.subr.mxu0 0.0
    %821 = vmatpush1.msra.mxu0 %v109
    %822 = vmatprep.subr.mxu0 0.0
    %823 = vmatpush1.msra.mxu0 %v108
    %824 = vmatprep.subr.mxu0 0.0
    %825 = vmatpush1.msra.mxu0 %v107
    %826 = vmatprep.subr.mxu0 0.0
    %827 = vmatpush1.msra.mxu0 %v106
    %828 = vmatprep.subr.mxu0 0.0
    %829 = vmatpush1.msra.mxu0 %v105
    %830 = vmatprep.subr.mxu0 0.0
    %831 = vmatpush1.msra.mxu0 %v104
    %832 = vmatprep.subr.mxu0 0.0
    %833 = vmatpush2.msra.mxu0 0.0
    %834 = vmatprep.subr.mxu0 0.0
    %835 = vmatpush2.msra.mxu0 0.0
    %836 = vmatprep.subr.mxu0 0.0
    %837 = vmatpush2.msra.mxu0 0.0
    %838 = vmatprep.subr.mxu0 0.0
    %839 = vmatpush2.msra.mxu0 0.0
    %840 = vmatprep.subr.mxu0 0.0
    %841 = vmatpush2.msra.mxu0 0.0
    %842 = vmatprep.subr.mxu0 0.0
    %843 = vmatpush2.msra.mxu0 0.0
    %844 = vmatprep.subr.mxu0 0.0
    %845 = vmatpush2.msra.mxu0 0.0
    %846 = vmatprep.subr.mxu0 0.0
    %847 = vmatpush2.msra.mxu0 0.0
    %848 = vmatprep.subr.mxu0 0.0
    %849 = vmatpush2.msra.mxu0 0.0
    %850 = vmatprep.subr.mxu0 0.0
    %851 = vmatpush2.msra.mxu0 0.0
    %852 = vmatprep.subr.mxu0 0.0
    %853 = vmatpush2.msra.mxu0 0.0
    %854 = vmatprep.subr.mxu0 0.0
    %855 = vmatpush2.msra.mxu0 0.0
    %856 = vmatprep.subr.mxu0 0.0
    %857 = vmatpush2.msra.mxu0 0.0
    %858 = vmatprep.subr.mxu0 0.0
    %859 = vmatpush2.msra.mxu0 0.0
    %860 = vmatprep.subr.mxu0 0.0
    %861 = vmatpush2.msra.mxu0 0.0
    %862 = vmatprep.subr.mxu0 0.0
    %863 = vmatpush2.msra.mxu0 0.0
    %864 = vmatprep.mubr.f32.mxu0 0.0
    %865 = vmatmul.mubr.f32.gmra.mxu0 %v798
    %v866 = vpop.f32.mrf.mxu0
    %v867 = vadd.f32 %v117, %v866
    %v868 = vpop.f32.mrf.mxu0
    %869 = vdwg.mxu0
    %v870 = vxor.u32 %v867, 2147483648
    %v871 = vmul.f32 %v870, 1.442695
    %v872 = vpow.pop %v871
    %v873 = vadd.f32 %v872, 1.0
    %v874 = vrcp.pop %v873
    %v875 = vmul.f32 1.0, %v874
    %877 = vrot.lane.b32.xlu0 %v867, 32
    %v878 = vpop.permute.xlu0 %877
    %v880 = vmul.f32 %v875, %v878
    %882 = vrot.lane.b32.xlu0 %v880, 64
    %v883 = vpop.permute.xlu0 %882
    %v885 = vadd.f32 %v867, %v883
    %v886 = vtanh.pop %v885
    %v887 = vsub.f32 1.0, %v875
    %889 = vrot.lane.b32.xlu0 %v886, 96
    %v890 = vpop.permute.xlu0 %889
    %v892 = vmul.f32 %v887, %v890
    %v893 = vmul.f32 %v875, %v794
    %v894 = vadd.f32 %v892, %v893
    %896 = vrot.lane.b32.xlu0 %v894, 96
    %v897 = vpop.permute.xlu0 %896
    %899 = vst.msk [vmem:[#allocation2 + $0x18] sm:$0xff] %vm97, %v897
    %v900 = vld [vmem:[#allocation9] sm:$0xff]
    %v901 = vld [vmem:[#allocation2] sm:$0xff]
    %v902 = vld [vmem:[#allocation2 + $0x8] sm:$0xff]
    %v903 = vld [vmem:[#allocation2 + $0x10] sm:$0xff]
    %v904 = vld [vmem:[#allocation2 + $0x18] sm:$0xff]
    %v906 = vsel %vm97, %v900, 0
    %908 = vmatprep.subr.mxu0 0.0
    %909 = vmatpush1.msra.mxu0 0.0
    %910 = vmatprep.subr.mxu0 0.0
    %911 = vmatpush1.msra.mxu0 0.0
    %912 = vmatprep.subr.mxu0 0.0
    %913 = vmatpush1.msra.mxu0 0.0
    %914 = vmatprep.subr.mxu0 0.0
    %915 = vmatpush1.msra.mxu0 0.0
    %916 = vmatprep.subr.mxu0 0.0
    %917 = vmatpush1.msra.mxu0 0.0
    %918 = vmatprep.subr.mxu0 0.0
    %919 = vmatpush1.msra.mxu0 0.0
    %920 = vmatprep.subr.mxu0 0.0
    %921 = vmatpush1.msra.mxu0 0.0
    %922 = vmatprep.subr.mxu0 0.0
    %923 = vmatpush1.msra.mxu0 0.0
    %924 = vmatprep.subr.mxu0 0.0
    %925 = vmatpush1.msra.mxu0 0.0
    %926 = vmatprep.subr.mxu0 0.0
    %927 = vmatpush1.msra.mxu0 0.0
    %928 = vmatprep.subr.mxu0 0.0
    %929 = vmatpush1.msra.mxu0 0.0
    %930 = vmatprep.subr.mxu0 0.0
    %931 = vmatpush1.msra.mxu0 0.0
    %932 = vmatprep.subr.mxu0 0.0
    %933 = vmatpush1.msra.mxu0 %v904
    %934 = vmatprep.subr.mxu0 0.0
    %935 = vmatpush1.msra.mxu0 %v903
    %936 = vmatprep.subr.mxu0 0.0
    %937 = vmatpush1.msra.mxu0 %v902
    %938 = vmatprep.subr.mxu0 0.0
    %939 = vmatpush1.msra.mxu0 %v901
    %940 = vmatprep.subr.mxu0 0.0
    %941 = vmatpush2.msra.mxu0 0.0
    %942 = vmatprep.subr.mxu0 0.0
    %943 = vmatpush2.msra.mxu0 0.0
    %944 = vmatprep.subr.mxu0 0.0
    %945 = vmatpush2.msra.mxu0 0.0
    %946 = vmatprep.subr.mxu0 0.0
    %947 = vmatpush2.msra.mxu0 0.0
    %948 = vmatprep.subr.mxu0 0.0
    %949 = vmatpush2.msra.mxu0 0.0
    %950 = vmatprep.subr.mxu0 0.0
    %951 = vmatpush2.msra.mxu0 0.0
    %952 = vmatprep.subr.mxu0 0.0
    %953 = vmatpush2.msra.mxu0 0.0
    %954 = vmatprep.subr.mxu0 0.0
    %955 = vmatpush2.msra.mxu0 0.0
    %956 = vmatprep.subr.mxu0 0.0
    %957 = vmatpush2.msra.mxu0 0.0
    %958 = vmatprep.subr.mxu0 0.0
    %959 = vmatpush2.msra.mxu0 0.0
    %960 = vmatprep.subr.mxu0 0.0
    %961 = vmatpush2.msra.mxu0 0.0
    %962 = vmatprep.subr.mxu0 0.0
    %963 = vmatpush2.msra.mxu0 0.0
    %964 = vmatprep.subr.mxu0 0.0
    %965 = vmatpush2.msra.mxu0 0.0
    %966 = vmatprep.subr.mxu0 0.0
    %967 = vmatpush2.msra.mxu0 0.0
    %968 = vmatprep.subr.mxu0 0.0
    %969 = vmatpush2.msra.mxu0 0.0
    %970 = vmatprep.subr.mxu0 0.0
    %971 = vmatpush2.msra.mxu0 0.0
    %972 = vmatprep.mubr.f32.mxu0 0.0
    %973 = vmatmul.mubr.f32.gmra.mxu0 %v906
    %v974 = vpop.f32.mrf.mxu0
    %v975 = vadd.f32 0.0, %v974
    %v976 = vpop.f32.mrf.mxu0
    %977 = vdwg.mxu0
    %v978 = vld [vmem:[%s6] sm:$0x1]
    %v980 = vlaneseq
    %v981 = vshrl.u32 %v980, 7
    %v982 = vsub.s32 0, %v981
    %v983 = vrot.slane %v978, %v982
    %v985 = vmul.f32 %v975, %v983
    %v986 = vsel %vm97, %v985, 0.0
    %987 = vadd.xlane.f32.xlu0 %v986
    %v988 = vpop.xlane.xlu0 %987
    %v989 = vld [vmem:[%s7] sm:$0x1]
    %v991 = vsel %vm97, %v989, 0
    %v994 = vsel %vm97, %v975, 0
    %996 = vmatprep.subr.mxu0 0.0
    %997 = vmatpush1.xpose.msra.mxu0 0.0
    %998 = vmatprep.subr.mxu0 0.0
    %999 = vmatpush1.xpose.msra.mxu0 0.0
    %1000 = vmatprep.subr.mxu0 0.0
    %1001 = vmatpush1.xpose.msra.mxu0 0.0
    %1002 = vmatprep.subr.mxu0 0.0
    %1003 = vmatpush1.xpose.msra.mxu0 0.0
    %1004 = vmatprep.subr.mxu0 0.0
    %1005 = vmatpush1.xpose.msra.mxu0 0.0
    %1006 = vmatprep.subr.mxu0 0.0
    %1007 = vmatpush1.xpose.msra.mxu0 0.0
    %1008 = vmatprep.subr.mxu0 0.0
    %1009 = vmatpush1.xpose.msra.mxu0 0.0
    %1010 = vmatprep.subr.mxu0 0.0
    %1011 = vmatpush1.xpose.msra.mxu0 0.0
    %1012 = vmatprep.subr.mxu0 0.0
    %1013 = vmatpush1.xpose.msra.mxu0 0.0
    %1014 = vmatprep.subr.mxu0 0.0
    %1015 = vmatpush1.xpose.msra.mxu0 0.0
    %1016 = vmatprep.subr.mxu0 0.0
    %1017 = vmatpush1.xpose.msra.mxu0 0.0
    %1018 = vmatprep.subr.mxu0 0.0
    %1019 = vmatpush1.xpose.msra.mxu0 0.0
    %1020 = vmatprep.subr.mxu0 0.0
    %1021 = vmatpush1.xpose.msra.mxu0 0.0
    %1022 = vmatprep.subr.mxu0 0.0
    %1023 = vmatpush1.xpose.msra.mxu0 0.0
    %1024 = vmatprep.subr.mxu0 0.0
    %1025 = vmatpush1.xpose.msra.mxu0 0.0
    %1026 = vmatprep.subr.mxu0 0.0
    %1027 = vmatpush1.xpose.msra.mxu0 %v994
    %1028 = vmatprep.subr.mxu0 0.0
    %1029 = vmatpush2.xpose.msra.mxu0 0.0
    %1030 = vmatprep.subr.mxu0 0.0
    %1031 = vmatpush2.xpose.msra.mxu0 0.0
    %1032 = vmatprep.subr.mxu0 0.0
    %1033 = vmatpush2.xpose.msra.mxu0 0.0
    %1034 = vmatprep.subr.mxu0 0.0
    %1035 = vmatpush2.xpose.msra.mxu0 0.0
    %1036 = vmatprep.subr.mxu0 0.0
    %1037 = vmatpush2.xpose.msra.mxu0 0.0
    %1038 = vmatprep.subr.mxu0 0.0
    %1039 = vmatpush2.xpose.msra.mxu0 0.0
    %1040 = vmatprep.subr.mxu0 0.0
    %1041 = vmatpush2.xpose.msra.mxu0 0.0
    %1042 = vmatprep.subr.mxu0 0.0
    %1043 = vmatpush2.xpose.msra.mxu0 0.0
    %1044 = vmatprep.subr.mxu0 0.0
    %1045 = vmatpush2.xpose.msra.mxu0 0.0
    %1046 = vmatprep.subr.mxu0 0.0
    %1047 = vmatpush2.xpose.msra.mxu0 0.0
    %1048 = vmatprep.subr.mxu0 0.0
    %1049 = vmatpush2.xpose.msra.mxu0 0.0
    %1050 = vmatprep.subr.mxu0 0.0
    %1051 = vmatpush2.xpose.msra.mxu0 0.0
    %1052 = vmatprep.subr.mxu0 0.0
    %1053 = vmatpush2.xpose.msra.mxu0 0.0
    %1054 = vmatprep.subr.mxu0 0.0
    %1055 = vmatpush2.xpose.msra.mxu0 0.0
    %1056 = vmatprep.subr.mxu0 0.0
    %1057 = vmatpush2.xpose.msra.mxu0 0.0
    %1058 = vmatprep.subr.mxu0 0.0
    %1059 = vmatpush2.xpose.msra.mxu0 0.0
    %1060 = vmatprep.mubr.f32.mxu0 0.0
    %1061 = vmatmul.mubr.f32.gmra.mxu0 %v991
    %v1062 = vpop.f32.mrf.mxu0
    %v1063 = vadd.f32 0.0, %v1062
    %v1064 = vpop.f32.mrf.mxu0
    %1065 = vdwg.mxu0
    %vm1066 = vcmask 64512
    %v1067 = vsel %vm1066, %v1063, 0.0
    %v1068 = vlaneseq
    %v1069 = vshrl.u32 %v1068, 7
    %v1070 = vsub.s32 0, %v1069
    %v1071 = vrot.slane %v1067, %v1070
    %v1072 = vadd.f32 %v988, %v1071
    %vm1073 = vcmp.gt.f32.partialorder %v1072, 0.0
    %v1074 = vmul.f32 %v1072, 0.2
    %v1075 = vsel %vm1073, %v1072, %v1074
    %v1076 = vld [vmem:[%s8] sm:$0xff]
    %vm1077 = vcmp.gt.f32.partialorder %v1076, 0.0
    %v1078 = vsel %vm1077, %v1075, -9e+15
    %1079 = vmax.xlane.f32.xlu0 %v1078
    %v1080 = vpop.xlane.xlu0 %1079
    %v1081 = vsub.f32 %v1078, %v1080
    %v1082 = vmul.f32 %v1081, 1.442695
    %v1083 = vpow.pop %v1082
    %1084 = vadd.xlane.f32.xlu0 %v1083
    %v1085 = vpop.xlane.xlu0 %1084
    %v1086 = vrcp.pop %v1085
    %v1087 = vmul.f32 %v1083, %v1086
    %1088 = vst [vmem:[#allocation12] sm:$0xff] %v1087
    // Predicated region
    $region58: #{tpu_custom_call.1} parent=1 // pred_check
      _
    $region59: #{tpu_custom_call.1} parent=1 // pred_check_branch
      %1090 = sbr.rel (0) target = $region61
    $region60: #{tpu_custom_call.1} parent=1 // pred_region
      %s1092 = ssub.s32 128, 128
      %1093 = vsyncadd [#allocation5], %s1092
      %s1095 = sshll.u32 [#allocation12], 4
      %s1096 = int_to_ptr.vmem [resolvable:$true] %s1095
      %1098 = dma.vmem_to_hbm [thread:$0]  %s1096, 128, %s9, [#allocation5]
    $region61: #{tpu_custom_call.1} parent=1 // pred_fallthru
      _
    // Predicated region
    $region62: #{tpu_custom_call.1} parent=1 // pred_check
      _
    $region63: #{tpu_custom_call.1} parent=1 // pred_check_branch
      %1100 = sbr.rel (0) target = $region65
    $region64: #{tpu_custom_call.1} parent=1 // pred_region
      %1101 = dma.done [#allocation5], 128
    $region65: #{tpu_custom_call.1} parent=1 // pred_fallthru
      _
    %1102 = vsyncpa [#allocation4], 1
    %1103 = vsyncpa [#allocation7], 1
    %1104 = vsyncpa [#allocation10], 1
    %1105 = vsyncpa [#allocation5], 1

</llo_original>
